<compile_context>
chip_gen: v7x
topology: tpu7x:2x2x1
jax: 0.10.0
libtpu: 0.0.40
codegen_flags: <defaults>
</compile_context>

<pallas_src>
import jax
import jax.numpy as jnp
from jax.experimental import pallas as pl
from jax.experimental.pallas import tpu as pltpu

HIDDEN = 32          # logical hidden_channels
HPAD = 128           # lane-padded hidden width
NUM_LAYERS = 2
ROW_PAD = 128        # node-count / edge-count row padding


def _vmem_limit_bytes():
    # Generation-aware: ~75% of per-core VMEM, clamped; safe 48 MiB fallback (fits v7x's
    # 64 MiB per-TC with headroom, raises the default scoped limit on v5e/v6e).
    try:
        cap = int(getattr(pltpu.get_tpu_info(), "vmem_capacity_bytes"))
        return max(32 * 1024 * 1024, min((cap * 3) // 4, 112 * 1024 * 1024))
    except Exception:
        return 48 * 1024 * 1024


VMEM_LIMIT = _vmem_limit_bytes()


# ---------------- helpers ----------------

def _round_up(n, m):
    return ((n + m - 1) // m) * m


def _pad2(x, rows, cols):
    return jnp.pad(x, ((0, rows - x.shape[0]), (0, cols - x.shape[1])))


def _pick_tile(n, cap=512):
    t = cap
    while t > 128:
        if n % t == 0:
            return t
        t //= 2
    return 128


# ---------------- Pallas kernels (hot path) ----------------

def _agg_conv_relu_kernel(a_ref, x_ref, root_ref, o_ref, acc_ref):
    # out = relu( sum_k A[:, k_blk] @ X'[k_blk, :]  +  root )      (root = x_dst@Wr + bias)
    k = pl.program_id(1)

    @pl.when(k == 0)
    def _():
        acc_ref[...] = root_ref[...]

    acc_ref[...] += jnp.dot(a_ref[...], x_ref[...],
                            preferred_element_type=jnp.float32)

    @pl.when(k == pl.num_programs(1) - 1)
    def _():
        o_ref[...] = jnp.maximum(acc_ref[...], 0.0).astype(o_ref.dtype)


def _edge_dot_kernel(fs_ref, fm_ref, o_ref):
    # Classifier tile: per-edge dot product, written lane-major as a (1, te) row.
    prod = fs_ref[...] * fm_ref[...]
    ones = jnp.ones((1, prod.shape[1]), prod.dtype)
    o_ref[...] = jax.lax.dot_general(
        ones, prod, dimension_numbers=(((1,), (1,)), ((), ())),
        preferred_element_type=jnp.float32)


# ---------------- pallas_call wrappers ----------------

def agg_conv_relu(a_cat, x_cat, root, out_dtype=jnp.bfloat16):
    """relu(a_cat @ x_cat + root).  a_cat: (n_dst, K) bf16, x_cat: (K, HPAD) bf16,
    root: (n_dst, HPAD) f32.  Row axis parallel, K reduction axis arbitrary (last)."""
    n_dst, k_tot = a_cat.shape
    h = x_cat.shape[1]
    tm = _pick_tile(n_dst)
    tk = _pick_tile(k_tot)
    grid = (n_dst // tm, k_tot // tk)

    flops = 2 * n_dst * k_tot * h
    bytes_accessed = (2 * n_dst * k_tot      # bf16 adjacency (dominant)
                      + 2 * k_tot * h        # bf16 pre-transformed sources
                      + 4 * n_dst * h        # f32 root
                      + 2 * n_dst * h)       # bf16 output

    return pl.pallas_call(
        _agg_conv_relu_kernel,
        out_shape=jax.ShapeDtypeStruct((n_dst, h), out_dtype),
        grid_spec=pltpu.PrefetchScalarGridSpec(
            num_scalar_prefetch=0,
            grid=grid,
            in_specs=[
                pl.BlockSpec((tm, tk), lambda i, k: (i, k)),   # adjacency tile
                pl.BlockSpec((tk, h), lambda i, k: (k, 0)),    # pre-transformed sources
                pl.BlockSpec((tm, h), lambda i, k: (i, 0)),    # root (fetched once per row tile)
            ],
            out_specs=pl.BlockSpec((tm, h), lambda i, k: (i, 0)),
            scratch_shapes=[pltpu.VMEM((tm, h), jnp.float32)],
        ),
        compiler_params=pltpu.CompilerParams(
            dimension_semantics=("parallel", "arbitrary"),
            vmem_limit_bytes=VMEM_LIMIT,
        ),
        cost_estimate=pl.CostEstimate(flops=flops, transcendentals=0,
                                      bytes_accessed=bytes_accessed),
    )(a_cat, x_cat, root)


def edge_dot(feat_s, feat_m, num_valid):
    e_pad, h = feat_s.shape
    te = _pick_tile(e_pad, cap=2048)
    grid = (e_pad // te,)
    out = pl.pallas_call(
        _edge_dot_kernel,
        out_shape=jax.ShapeDtypeStruct((1, e_pad), jnp.float32),
        grid_spec=pltpu.PrefetchScalarGridSpec(
            num_scalar_prefetch=0,
            grid=grid,
            in_specs=[pl.BlockSpec((te, h), lambda i: (i, 0)),
                      pl.BlockSpec((te, h), lambda i: (i, 0))],
            out_specs=pl.BlockSpec((1, te), lambda i: (0, i)),
        ),
        compiler_params=pltpu.CompilerParams(
            dimension_semantics=("parallel",),
            vmem_limit_bytes=VMEM_LIMIT,
        ),
        cost_estimate=pl.CostEstimate(flops=2 * e_pad * h, transcendentals=0,
                                      bytes_accessed=2 * 2 * e_pad * h + 4 * e_pad),
    )(feat_s, feat_m)
    return out[0, :num_valid]


# ---------------- adjacency construction (built once per static graph) ----------------

def mean_agg_matrix(edge_index, num_src, num_dst):
    """Dense mean-aggregation matrix (num_dst, num_src): PyG SAGEConv aggr='mean'."""
    src, dst = edge_index[0], edge_index[1]
    a = jnp.zeros((num_dst, num_src), jnp.float32).at[dst, src].add(1.0)
    deg = a.sum(axis=1, keepdims=True)
    return a / jnp.where(deg > 0, deg, 1.0)


def gcn_norm_matrix(edge_index, num_nodes):
    """Dense symmetric-normalized adjacency with *remaining* self loops (PyG gcn_norm)."""
    src, dst = edge_index[0], edge_index[1]
    a = jnp.zeros((num_nodes, num_nodes), jnp.float32).at[dst, src].add(1.0)
    diag = jnp.diagonal(a)
    a = a + jnp.diag(jnp.where(diag > 0, 0.0, 1.0))   # add self loop only where missing
    deg = a.sum(axis=1)
    dinv = jnp.where(deg > 0, 1.0 / jnp.sqrt(deg), 0.0)
    return dinv[:, None] * a * dinv[None, :]


def build_adjacency(edges, n_s, n_m, n_r):
    """Build padded bf16 dense aggregation matrices once (outside the jitted forward).
    mRNA branches are concatenated along K to match the stacked pre-transformed sources."""
    n_sp, n_mp, n_rp = (_round_up(n, ROW_PAD) for n in (n_s, n_m, n_r))
    rev = lambda e: jnp.stack([e[1], e[0]], axis=0)
    e_sm, e_rm, e_sim = edges["srna_to_mrna"], edges["rbp_to_mrna"], edges["similar"]

    A_sm = _pad2(mean_agg_matrix(e_sm, n_s, n_m), n_mp, n_sp)          # srna -> mrna
    A_rm = _pad2(mean_agg_matrix(e_rm, n_r, n_m), n_mp, n_rp)          # rbp  -> mrna
    Ah_sim = _pad2(gcn_norm_matrix(e_sim, n_m), n_mp, n_mp)            # mrna similar mrna
    Ah_rsim = _pad2(gcn_norm_matrix(rev(e_sim), n_m), n_mp, n_mp)      # rev_similar
    A_ms = _pad2(mean_agg_matrix(rev(e_sm), n_m, n_s), n_sp, n_mp)     # mrna -> srna
    A_mr = _pad2(mean_agg_matrix(rev(e_rm), n_m, n_r), n_rp, n_mp)     # mrna -> rbp

    bf = jnp.bfloat16
    return dict(
        mrna=jnp.concatenate([A_sm, A_rm, Ah_sim, Ah_rsim], axis=1).astype(bf),
        srna=A_ms.astype(bf),
        rbp=A_mr.astype(bf),
    )


# ---------------- Parameter init (deterministic, synthetic) ----------------

def _glorot_t_pad(key, h, hpad):
    lim = (6.0 / (h + h)) ** 0.5
    w = jax.random.uniform(key, (h, h), jnp.float32, -lim, lim)
    return _pad2(w, hpad, hpad)         # W^T, zero-padded so x @ W^T works on padded lanes


def init_sage(key, h, hpad):
    k1, k2 = jax.random.split(key)
    return dict(wl_t=_glorot_t_pad(k1, h, hpad), wr_t=_glorot_t_pad(k2, h, hpad),
                b=jnp.zeros((1, hpad), jnp.float32))


def init_gcn(key, h, hpad):
    return dict(w_t=_glorot_t_pad(key, h, hpad), b=jnp.zeros((1, hpad), jnp.float32))


def init_layer(key, h, hpad):
    ks = jax.random.split(key, 6)
    return dict(
        sm=init_sage(ks[0], h, hpad),    # (srna,  targets,      mrna)
        ms=init_sage(ks[1], h, hpad),    # (mrna,  rev_targets,  srna)
        rm=init_sage(ks[2], h, hpad),    # (rbp,   rbp_to_mrna,  mrna)
        mr=init_sage(ks[3], h, hpad),    # (mrna,  rev_rbp,      rbp)
        sim=init_gcn(ks[4], h, hpad),    # (mrna,  similar,      mrna)
        rsim=init_gcn(ks[5], h, hpad),   # (mrna,  rev_similar,  mrna)
    )


def _emb(key, n, h, hpad):
    e = jax.random.normal(key, (n, h), jnp.float32)          # nn.Embedding ~ N(0,1)
    return jnp.pad(e, ((0, 0), (0, hpad - h)))


def init_params(key, h, hpad, n_srna, n_mrna, n_rbp):
    ks = jax.random.split(key, 3 + NUM_LAYERS)
    return dict(
        srna_emb=_emb(ks[0], n_srna, h, hpad),
        mrna_emb=_emb(ks[1], n_mrna, h, hpad),
        rbp_emb=_emb(ks[2], n_rbp, h, hpad),
        layers=[init_layer(ks[3 + i], h, hpad) for i in range(NUM_LAYERS)],
    )


# ---------------- per-layer glue (hoisted linear transforms) ----------------

def _pret(x_bf, w_t):
    # One-time per-layer source transform; result consumed by the kernels as bf16.
    y = jnp.dot(x_bf, w_t.astype(jnp.bfloat16), preferred_element_type=jnp.float32)
    return y.astype(jnp.bfloat16)


def _root(x_bf, wr_t, b):
    # Root term x_dst @ Wr^T + bias, kept in f32 (seeds the kernel accumulator).
    return jnp.dot(x_bf, wr_t.astype(jnp.bfloat16),
                   preferred_element_type=jnp.float32) + b


# ---------------- GraphRNA forward ----------------

def graph_rna_forward(params, node_ids, adj, edge_label_index):
    bf = jnp.bfloat16
    n_sp, n_mp, n_rp = adj["srna"].shape[0], adj["mrna"].shape[0], adj["rbp"].shape[0]

    # Embedding lookup, row-pad, pre-cast to bf16 once (lane dim already padded to HPAD).
    x_s = _pad2(jnp.take(params["srna_emb"], node_ids["srna"], axis=0), n_sp, HPAD).astype(bf)
    x_m = _pad2(jnp.take(params["mrna_emb"], node_ids["mrna"], axis=0), n_mp, HPAD).astype(bf)
    x_r = _pad2(jnp.take(params["rbp_emb"], node_ids["rbp"], axis=0), n_rp, HPAD).astype(bf)

    for L in params["layers"]:
        # Stacked pre-transformed sources for the mRNA destination, in the same K order as
        # the concatenated adjacency [A_sm | A_rm | Ah_sim | Ah_rsim].
        x_cat_m = jnp.concatenate([
            _pret(x_s, L["sm"]["wl_t"]),
            _pret(x_r, L["rm"]["wl_t"]),
            _pret(x_m, L["sim"]["w_t"]),
            _pret(x_m, L["rsim"]["w_t"]),
        ], axis=0)
        # HeteroConv(aggr='sum'): merged root transform / summed biases for the mRNA dst.
        root_m = _root(x_m, L["sm"]["wr_t"] + L["rm"]["wr_t"],
                       L["sm"]["b"] + L["rm"]["b"] + L["sim"]["b"] + L["rsim"]["b"])
        x_cat_s = _pret(x_m, L["ms"]["wl_t"])
        root_s = _root(x_s, L["ms"]["wr_t"], L["ms"]["b"])
        x_cat_r = _pret(x_m, L["mr"]["wl_t"])
        root_r = _root(x_r, L["mr"]["wr_t"], L["mr"]["b"])

        new_m = agg_conv_relu(adj["mrna"], x_cat_m, root_m)
        new_s = agg_conv_relu(adj["srna"], x_cat_s, root_s)
        new_r = agg_conv_relu(adj["rbp"], x_cat_r, root_r)
        x_s, x_m, x_r = new_s, new_m, new_r

    # Classifier: gather (glue) + tiled lane-major per-edge dot product (Pallas).
    n_lab = edge_label_index.shape[1]
    e_pad = _round_up(n_lab, ROW_PAD)
    feat_s = _pad2(jnp.take(x_s, edge_label_index[0], axis=0), e_pad, HPAD)
    feat_m = _pad2(jnp.take(x_m, edge_label_index[1], axis=0), e_pad, HPAD)
    return edge_dot(feat_s, feat_m, n_lab)


# ---------------- Example run ----------------

if __name__ == "__main__":
    key = jax.random.PRNGKey(0)
    n_srna, n_mrna, n_rbp = 12, 16, 8
    n_e_sm, n_e_rm, n_e_sim, n_label = 24, 16, 20, 10

    ks = jax.random.split(key, 10)
    params = init_params(ks[0], HIDDEN, HPAD, n_srna, n_mrna, n_rbp)

    node_ids = dict(
        srna=jnp.arange(n_srna, dtype=jnp.int32),
        mrna=jnp.arange(n_mrna, dtype=jnp.int32),
        rbp=jnp.arange(n_rbp, dtype=jnp.int32),
    )

    e_sm = jnp.stack([
        jax.random.randint(ks[1], (n_e_sm,), 0, n_srna, jnp.int32),
        jax.random.randint(ks[2], (n_e_sm,), 0, n_mrna, jnp.int32),
    ])
    e_rm = jnp.stack([
        jax.random.randint(ks[3], (n_e_rm,), 0, n_rbp, jnp.int32),
        jax.random.randint(ks[4], (n_e_rm,), 0, n_mrna, jnp.int32),
    ])
    sim_src = jax.random.randint(ks[5], (n_e_sim,), 0, n_mrna, jnp.int32)
    sim_dst = jax.random.randint(ks[6], (n_e_sim,), 0, n_mrna, jnp.int32)
    sim_dst = jnp.where(sim_dst == sim_src, (sim_dst + 1) % n_mrna, sim_dst)
    e_sim = jnp.stack([sim_src, sim_dst])

    edge_label_index = jnp.stack([
        jax.random.randint(ks[7], (n_label,), 0, n_srna, jnp.int32),
        jax.random.randint(ks[8], (n_label,), 0, n_mrna, jnp.int32),
    ])

    edges = dict(srna_to_mrna=e_sm, rbp_to_mrna=e_rm, similar=e_sim)

    # Adjacency is static per graph: build once, outside the jitted forward.
    adj = build_adjacency(edges, n_srna, n_mrna, n_rbp)
    adj = jax.tree_util.tree_map(jax.block_until_ready, adj)

    fwd = jax.jit(graph_rna_forward)
    pred = fwd(params, node_ids, adj, edge_label_index)
    jax.block_until_ready(pred)
    assert pred.shape == (n_label,) and pred.dtype == jnp.float32
    print("KERNEL_OK")
</pallas_src>

<mosaic_0001>
module attributes {stable_mosaic.version = 11 : i64} {
  func.func @_agg_conv_relu_kernel(%arg0: i32, %arg1: i32, %arg2: memref<128x512xbf16, #tpu.memory_space<vmem>>, %arg3: memref<512x128xbf16, #tpu.memory_space<vmem>>, %arg4: memref<128x128xf32, #tpu.memory_space<vmem>>, %arg5: memref<128x128xbf16, #tpu.memory_space<vmem>>, %arg6: memref<128x128xf32, #tpu.memory_space<vmem>>) attributes {dimension_semantics = [#tpu.dimension_semantics<parallel>, #tpu.dimension_semantics<arbitrary>], iteration_bounds = array<i64: 1, 1>, scalar_prefetch = 0 : i64, scratch_operands = 1 : i64, tpu.core_type = #tpu.core_type<tc>, window_params = [{transform_indices = @transform_0, window_bounds = array<i64: 128, 512>}, {transform_indices = @transform_1, window_bounds = array<i64: 512, 128>}, {transform_indices = @transform_2, window_bounds = array<i64: 128, 128>}, {transform_indices = @transform_3, window_bounds = array<i64: 128, 128>}]} {
    %c0_i32 = arith.constant 0 : i32
    %0 = arith.cmpi eq, %arg1, %c0_i32 : i32
    %1 = arith.extui %0 : i1 to i32
    %c0_i32_0 = arith.constant 0 : i32
    %2 = arith.cmpi ne, %1, %c0_i32_0 : i32
    scf.if %2 {
      %c0_10 = arith.constant 0 : index
      %c0_11 = arith.constant 0 : index
      %12 = vector.load %arg4[%c0_10, %c0_11] : memref<128x128xf32, #tpu.memory_space<vmem>>, vector<128x128xf32>
      %c0_12 = arith.constant 0 : index
      %c0_13 = arith.constant 0 : index
      %13 = vector.load %arg6[%c0_12, %c0_13] : memref<128x128xf32, #tpu.memory_space<vmem>>, vector<128x128xf32>
      tpu.vector_store %arg6[%c0_12, %c0_13], %12 {strides = array<i32>} : memref<128x128xf32, #tpu.memory_space<vmem>>, vector<128x128xf32>,
    } else {
    }
    %c0 = arith.constant 0 : index
    %c0_1 = arith.constant 0 : index
    %3 = vector.load %arg6[%c0, %c0_1] : memref<128x128xf32, #tpu.memory_space<vmem>>, vector<128x128xf32>
    %c0_2 = arith.constant 0 : index
    %c0_3 = arith.constant 0 : index
    %4 = vector.load %arg2[%c0_2, %c0_3] : memref<128x512xbf16, #tpu.memory_space<vmem>>, vector<128x512xbf16>
    %c0_4 = arith.constant 0 : index
    %c0_5 = arith.constant 0 : index
    %5 = vector.load %arg3[%c0_4, %c0_5] : memref<512x128xbf16, #tpu.memory_space<vmem>>, vector<512x128xbf16>
    %cst = arith.constant dense<0.000000e+00> : vector<128x128xf32>
    %6 = tpu.matmul %4, %5, %cst {dimension_numbers = #tpu.dot_dimension_numbers<[1], [0], [0], [1], [0, 0, 1, 1], [], []>} : vector<128x512xbf16>, vector<512x128xbf16>, vector<128x128xf32> -> vector<128x128xf32>
    %7 = arith.addf %3, %6 : vector<128x128xf32>
    %c0_6 = arith.constant 0 : index
    %c0_7 = arith.constant 0 : index
    %8 = vector.load %arg6[%c0_6, %c0_7] : memref<128x128xf32, #tpu.memory_space<vmem>>, vector<128x128xf32>
    tpu.vector_store %arg6[%c0_6, %c0_7], %7 {strides = array<i32>} : memref<128x128xf32, #tpu.memory_space<vmem>>, vector<128x128xf32>,
    %c0_i32_8 = arith.constant 0 : i32
    %9 = arith.cmpi eq, %arg1, %c0_i32_8 : i32
    %10 = arith.extui %9 : i1 to i32
    %c0_i32_9 = arith.constant 0 : i32
    %11 = arith.cmpi ne, %10, %c0_i32_9 : i32
    scf.if %11 {
      %c0_10 = arith.constant 0 : index
      %c0_11 = arith.constant 0 : index
      %12 = vector.load %arg6[%c0_10, %c0_11] : memref<128x128xf32, #tpu.memory_space<vmem>>, vector<128x128xf32>
      %cst_12 = arith.constant 0.000000e+00 : f32
      %13 = vector.broadcast %cst_12 : f32 to vector<128x128xf32>
      %14 = arith.maximumf %12, %13 : vector<128x128xf32>
      %15 = arith.truncf %14 : vector<128x128xf32> to vector<128x128xbf16>
      %c0_13 = arith.constant 0 : index
      %c0_14 = arith.constant 0 : index
      %16 = vector.load %arg5[%c0_13, %c0_14] : memref<128x128xbf16, #tpu.memory_space<vmem>>, vector<128x128xbf16>
      tpu.vector_store %arg5[%c0_13, %c0_14], %15 {strides = array<i32>} : memref<128x128xbf16, #tpu.memory_space<vmem>>, vector<128x128xbf16>,
    } else {
    }
    return
  }
  func.func @transform_0(%arg0: i32, %arg1: i32) -> (i32, i32) {
    %c0_i32 = arith.constant 0 : i32
    return %arg0, %arg1 : i32, i32
  }
  func.func @transform_1(%arg0: i32, %arg1: i32) -> (i32, i32) {
    %c0_i32 = arith.constant 0 : i32
    %c0_i32_0 = arith.constant 0 : i32
    return %arg1, %c0_i32 : i32, i32
  }
  func.func @transform_2(%arg0: i32, %arg1: i32) -> (i32, i32) {
    %c0_i32 = arith.constant 0 : i32
    %c0_i32_0 = arith.constant 0 : i32
    return %arg0, %c0_i32 : i32, i32
  }
  func.func @transform_3(%arg0: i32, %arg1: i32) -> (i32, i32) {
    %c0_i32 = arith.constant 0 : i32
    %c0_i32_0 = arith.constant 0 : i32
    return %arg0, %c0_i32 : i32, i32
  }
}

module attributes {stable_mosaic.version = 11 : i64} {
  func.func @_agg_conv_relu_kernel(%arg0: i32, %arg1: i32, %arg2: memref<128x128xbf16, #tpu.memory_space<vmem>>, %arg3: memref<128x128xbf16, #tpu.memory_space<vmem>>, %arg4: memref<128x128xf32, #tpu.memory_space<vmem>>, %arg5: memref<128x128xbf16, #tpu.memory_space<vmem>>, %arg6: memref<128x128xf32, #tpu.memory_space<vmem>>) attributes {dimension_semantics = [#tpu.dimension_semantics<parallel>, #tpu.dimension_semantics<arbitrary>], iteration_bounds = array<i64: 1, 1>, scalar_prefetch = 0 : i64, scratch_operands = 1 : i64, tpu.core_type = #tpu.core_type<tc>, window_params = [{transform_indices = @transform_0, window_bounds = array<i64: 128, 128>}, {transform_indices = @transform_1, window_bounds = array<i64: 128, 128>}, {transform_indices = @transform_2, window_bounds = array<i64: 128, 128>}, {transform_indices = @transform_3, window_bounds = array<i64: 128, 128>}]} {
    %c0_i32 = arith.constant 0 : i32
    %0 = arith.cmpi eq, %arg1, %c0_i32 : i32
    %1 = arith.extui %0 : i1 to i32
    %c0_i32_0 = arith.constant 0 : i32
    %2 = arith.cmpi ne, %1, %c0_i32_0 : i32
    scf.if %2 {
      %c0_10 = arith.constant 0 : index
      %c0_11 = arith.constant 0 : index
      %12 = vector.load %arg4[%c0_10, %c0_11] : memref<128x128xf32, #tpu.memory_space<vmem>>, vector<128x128xf32>
      %c0_12 = arith.constant 0 : index
      %c0_13 = arith.constant 0 : index
      %13 = vector.load %arg6[%c0_12, %c0_13] : memref<128x128xf32, #tpu.memory_space<vmem>>, vector<128x128xf32>
      tpu.vector_store %arg6[%c0_12, %c0_13], %12 {strides = array<i32>} : memref<128x128xf32, #tpu.memory_space<vmem>>, vector<128x128xf32>,
    } else {
    }
    %c0 = arith.constant 0 : index
    %c0_1 = arith.constant 0 : index
    %3 = vector.load %arg6[%c0, %c0_1] : memref<128x128xf32, #tpu.memory_space<vmem>>, vector<128x128xf32>
    %c0_2 = arith.constant 0 : index
    %c0_3 = arith.constant 0 : index
    %4 = vector.load %arg2[%c0_2, %c0_3] : memref<128x128xbf16, #tpu.memory_space<vmem>>, vector<128x128xbf16>
    %c0_4 = arith.constant 0 : index
    %c0_5 = arith.constant 0 : index
    %5 = vector.load %arg3[%c0_4, %c0_5] : memref<128x128xbf16, #tpu.memory_space<vmem>>, vector<128x128xbf16>
    %cst = arith.constant dense<0.000000e+00> : vector<128x128xf32>
    %6 = tpu.matmul %4, %5, %cst {dimension_numbers = #tpu.dot_dimension_numbers<[1], [0], [0], [1], [0, 0, 1, 1], [], []>} : vector<128x128xbf16>, vector<128x128xbf16>, vector<128x128xf32> -> vector<128x128xf32>
    %7 = arith.addf %3, %6 : vector<128x128xf32>
    %c0_6 = arith.constant 0 : index
    %c0_7 = arith.constant 0 : index
    %8 = vector.load %arg6[%c0_6, %c0_7] : memref<128x128xf32, #tpu.memory_space<vmem>>, vector<128x128xf32>
    tpu.vector_store %arg6[%c0_6, %c0_7], %7 {strides = array<i32>} : memref<128x128xf32, #tpu.memory_space<vmem>>, vector<128x128xf32>,
    %c0_i32_8 = arith.constant 0 : i32
    %9 = arith.cmpi eq, %arg1, %c0_i32_8 : i32
    %10 = arith.extui %9 : i1 to i32
    %c0_i32_9 = arith.constant 0 : i32
    %11 = arith.cmpi ne, %10, %c0_i32_9 : i32
    scf.if %11 {
      %c0_10 = arith.constant 0 : index
      %c0_11 = arith.constant 0 : index
      %12 = vector.load %arg6[%c0_10, %c0_11] : memref<128x128xf32, #tpu.memory_space<vmem>>, vector<128x128xf32>
      %cst_12 = arith.constant 0.000000e+00 : f32
      %13 = vector.broadcast %cst_12 : f32 to vector<128x128xf32>
      %14 = arith.maximumf %12, %13 : vector<128x128xf32>
      %15 = arith.truncf %14 : vector<128x128xf32> to vector<128x128xbf16>
      %c0_13 = arith.constant 0 : index
      %c0_14 = arith.constant 0 : index
      %16 = vector.load %arg5[%c0_13, %c0_14] : memref<128x128xbf16, #tpu.memory_space<vmem>>, vector<128x128xbf16>
      tpu.vector_store %arg5[%c0_13, %c0_14], %15 {strides = array<i32>} : memref<128x128xbf16, #tpu.memory_space<vmem>>, vector<128x128xbf16>,
    } else {
    }
    return
  }
  func.func @transform_0(%arg0: i32, %arg1: i32) -> (i32, i32) {
    %c0_i32 = arith.constant 0 : i32
    return %arg0, %arg1 : i32, i32
  }
  func.func @transform_1(%arg0: i32, %arg1: i32) -> (i32, i32) {
    %c0_i32 = arith.constant 0 : i32
    %c0_i32_0 = arith.constant 0 : i32
    return %arg1, %c0_i32 : i32, i32
  }
  func.func @transform_2(%arg0: i32, %arg1: i32) -> (i32, i32) {
    %c0_i32 = arith.constant 0 : i32
    %c0_i32_0 = arith.constant 0 : i32
    return %arg0, %c0_i32 : i32, i32
  }
  func.func @transform_3(%arg0: i32, %arg1: i32) -> (i32, i32) {
    %c0_i32 = arith.constant 0 : i32
    %c0_i32_0 = arith.constant 0 : i32
    return %arg0, %c0_i32 : i32, i32
  }
}

module attributes {stable_mosaic.version = 11 : i64} {
  func.func @_agg_conv_relu_kernel(%arg0: i32, %arg1: i32, %arg2: memref<128x512xbf16, #tpu.memory_space<vmem>>, %arg3: memref<512x128xbf16, #tpu.memory_space<vmem>>, %arg4: memref<128x128xf32, #tpu.memory_space<vmem>>, %arg5: memref<128x128xbf16, #tpu.memory_space<vmem>>, %arg6: memref<128x128xf32, #tpu.memory_space<vmem>>) attributes {dimension_semantics = [#tpu.dimension_semantics<parallel>, #tpu.dimension_semantics<arbitrary>], iteration_bounds = array<i64: 1, 1>, scalar_prefetch = 0 : i64, scratch_operands = 1 : i64, tpu.core_type = #tpu.core_type<tc>, window_params = [{transform_indices = @transform_0, window_bounds = array<i64: 128, 512>}, {transform_indices = @transform_1, window_bounds = array<i64: 512, 128>}, {transform_indices = @transform_2, window_bounds = array<i64: 128, 128>}, {transform_indices = @transform_3, window_bounds = array<i64: 128, 128>}]} {
    %c0_i32 = arith.constant 0 : i32
    %0 = arith.cmpi eq, %arg1, %c0_i32 : i32
    %1 = arith.extui %0 : i1 to i32
    %c0_i32_0 = arith.constant 0 : i32
    %2 = arith.cmpi ne, %1, %c0_i32_0 : i32
    scf.if %2 {
      %c0_10 = arith.constant 0 : index
      %c0_11 = arith.constant 0 : index
      %12 = vector.load %arg4[%c0_10, %c0_11] : memref<128x128xf32, #tpu.memory_space<vmem>>, vector<128x128xf32>
      %c0_12 = arith.constant 0 : index
      %c0_13 = arith.constant 0 : index
      %13 = vector.load %arg6[%c0_12, %c0_13] : memref<128x128xf32, #tpu.memory_space<vmem>>, vector<128x128xf32>
      tpu.vector_store %arg6[%c0_12, %c0_13], %12 {strides = array<i32>} : memref<128x128xf32, #tpu.memory_space<vmem>>, vector<128x128xf32>,
    } else {
    }
    %c0 = arith.constant 0 : index
    %c0_1 = arith.constant 0 : index
    %3 = vector.load %arg6[%c0, %c0_1] : memref<128x128xf32, #tpu.memory_space<vmem>>, vector<128x128xf32>
    %c0_2 = arith.constant 0 : index
    %c0_3 = arith.constant 0 : index
    %4 = vector.load %arg2[%c0_2, %c0_3] : memref<128x512xbf16, #tpu.memory_space<vmem>>, vector<128x512xbf16>
    %c0_4 = arith.constant 0 : index
    %c0_5 = arith.constant 0 : index
    %5 = vector.load %arg3[%c0_4, %c0_5] : memref<512x128xbf16, #tpu.memory_space<vmem>>, vector<512x128xbf16>
    %cst = arith.constant dense<0.000000e+00> : vector<128x128xf32>
    %6 = tpu.matmul %4, %5, %cst {dimension_numbers = #tpu.dot_dimension_numbers<[1], [0], [0], [1], [0, 0, 1, 1], [], []>} : vector<128x512xbf16>, vector<512x128xbf16>, vector<128x128xf32> -> vector<128x128xf32>
    %7 = arith.addf %3, %6 : vector<128x128xf32>
    %c0_6 = arith.constant 0 : index
    %c0_7 = arith.constant 0 : index
    %8 = vector.load %arg6[%c0_6, %c0_7] : memref<128x128xf32, #tpu.memory_space<vmem>>, vector<128x128xf32>
    tpu.vector_store %arg6[%c0_6, %c0_7], %7 {strides = array<i32>} : memref<128x128xf32, #tpu.memory_space<vmem>>, vector<128x128xf32>,
    %c0_i32_8 = arith.constant 0 : i32
    %9 = arith.cmpi eq, %arg1, %c0_i32_8 : i32
    %10 = arith.extui %9 : i1 to i32
    %c0_i32_9 = arith.constant 0 : i32
    %11 = arith.cmpi ne, %10, %c0_i32_9 : i32
    scf.if %11 {
      %c0_10 = arith.constant 0 : index
      %c0_11 = arith.constant 0 : index
      %12 = vector.load %arg6[%c0_10, %c0_11] : memref<128x128xf32, #tpu.memory_space<vmem>>, vector<128x128xf32>
      %cst_12 = arith.constant 0.000000e+00 : f32
      %13 = vector.broadcast %cst_12 : f32 to vector<128x128xf32>
      %14 = arith.maximumf %12, %13 : vector<128x128xf32>
      %15 = arith.truncf %14 : vector<128x128xf32> to vector<128x128xbf16>
      %c0_13 = arith.constant 0 : index
      %c0_14 = arith.constant 0 : index
      %16 = vector.load %arg5[%c0_13, %c0_14] : memref<128x128xbf16, #tpu.memory_space<vmem>>, vector<128x128xbf16>
      tpu.vector_store %arg5[%c0_13, %c0_14], %15 {strides = array<i32>} : memref<128x128xbf16, #tpu.memory_space<vmem>>, vector<128x128xbf16>,
    } else {
    }
    return
  }
  func.func @transform_0(%arg0: i32, %arg1: i32) -> (i32, i32) {
    %c0_i32 = arith.constant 0 : i32
    return %arg0, %arg1 : i32, i32
  }
  func.func @transform_1(%arg0: i32, %arg1: i32) -> (i32, i32) {
    %c0_i32 = arith.constant 0 : i32
    %c0_i32_0 = arith.constant 0 : i32
    return %arg1, %c0_i32 : i32, i32
  }
  func.func @transform_2(%arg0: i32, %arg1: i32) -> (i32, i32) {
    %c0_i32 = arith.constant 0 : i32
    %c0_i32_0 = arith.constant 0 : i32
    return %arg0, %c0_i32 : i32, i32
  }
  func.func @transform_3(%arg0: i32, %arg1: i32) -> (i32, i32) {
    %c0_i32 = arith.constant 0 : i32
    %c0_i32_0 = arith.constant 0 : i32
    return %arg0, %c0_i32 : i32, i32
  }
}

module attributes {stable_mosaic.version = 11 : i64} {
  func.func @_agg_conv_relu_kernel(%arg0: i32, %arg1: i32, %arg2: memref<128x128xbf16, #tpu.memory_space<vmem>>, %arg3: memref<128x128xbf16, #tpu.memory_space<vmem>>, %arg4: memref<128x128xf32, #tpu.memory_space<vmem>>, %arg5: memref<128x128xbf16, #tpu.memory_space<vmem>>, %arg6: memref<128x128xf32, #tpu.memory_space<vmem>>) attributes {dimension_semantics = [#tpu.dimension_semantics<parallel>, #tpu.dimension_semantics<arbitrary>], iteration_bounds = array<i64: 1, 1>, scalar_prefetch = 0 : i64, scratch_operands = 1 : i64, tpu.core_type = #tpu.core_type<tc>, window_params = [{transform_indices = @transform_0, window_bounds = array<i64: 128, 128>}, {transform_indices = @transform_1, window_bounds = array<i64: 128, 128>}, {transform_indices = @transform_2, window_bounds = array<i64: 128, 128>}, {transform_indices = @transform_3, window_bounds = array<i64: 128, 128>}]} {
    %c0_i32 = arith.constant 0 : i32
    %0 = arith.cmpi eq, %arg1, %c0_i32 : i32
    %1 = arith.extui %0 : i1 to i32
    %c0_i32_0 = arith.constant 0 : i32
    %2 = arith.cmpi ne, %1, %c0_i32_0 : i32
    scf.if %2 {
      %c0_10 = arith.constant 0 : index
      %c0_11 = arith.constant 0 : index
      %12 = vector.load %arg4[%c0_10, %c0_11] : memref<128x128xf32, #tpu.memory_space<vmem>>, vector<128x128xf32>
      %c0_12 = arith.constant 0 : index
      %c0_13 = arith.constant 0 : index
      %13 = vector.load %arg6[%c0_12, %c0_13] : memref<128x128xf32, #tpu.memory_space<vmem>>, vector<128x128xf32>
      tpu.vector_store %arg6[%c0_12, %c0_13], %12 {strides = array<i32>} : memref<128x128xf32, #tpu.memory_space<vmem>>, vector<128x128xf32>,
    } else {
    }
    %c0 = arith.constant 0 : index
    %c0_1 = arith.constant 0 : index
    %3 = vector.load %arg6[%c0, %c0_1] : memref<128x128xf32, #tpu.memory_space<vmem>>, vector<128x128xf32>
    %c0_2 = arith.constant 0 : index
    %c0_3 = arith.constant 0 : index
    %4 = vector.load %arg2[%c0_2, %c0_3] : memref<128x128xbf16, #tpu.memory_space<vmem>>, vector<128x128xbf16>
    %c0_4 = arith.constant 0 : index
    %c0_5 = arith.constant 0 : index
    %5 = vector.load %arg3[%c0_4, %c0_5] : memref<128x128xbf16, #tpu.memory_space<vmem>>, vector<128x128xbf16>
    %cst = arith.constant dense<0.000000e+00> : vector<128x128xf32>
    %6 = tpu.matmul %4, %5, %cst {dimension_numbers = #tpu.dot_dimension_numbers<[1], [0], [0], [1], [0, 0, 1, 1], [], []>} : vector<128x128xbf16>, vector<128x128xbf16>, vector<128x128xf32> -> vector<128x128xf32>
    %7 = arith.addf %3, %6 : vector<128x128xf32>
    %c0_6 = arith.constant 0 : index
    %c0_7 = arith.constant 0 : index
    %8 = vector.load %arg6[%c0_6, %c0_7] : memref<128x128xf32, #tpu.memory_space<vmem>>, vector<128x128xf32>
    tpu.vector_store %arg6[%c0_6, %c0_7], %7 {strides = array<i32>} : memref<128x128xf32, #tpu.memory_space<vmem>>, vector<128x128xf32>,
    %c0_i32_8 = arith.constant 0 : i32
    %9 = arith.cmpi eq, %arg1, %c0_i32_8 : i32
    %10 = arith.extui %9 : i1 to i32
    %c0_i32_9 = arith.constant 0 : i32
    %11 = arith.cmpi ne, %10, %c0_i32_9 : i32
    scf.if %11 {
      %c0_10 = arith.constant 0 : index
      %c0_11 = arith.constant 0 : index
      %12 = vector.load %arg6[%c0_10, %c0_11] : memref<128x128xf32, #tpu.memory_space<vmem>>, vector<128x128xf32>
      %cst_12 = arith.constant 0.000000e+00 : f32
      %13 = vector.broadcast %cst_12 : f32 to vector<128x128xf32>
      %14 = arith.maximumf %12, %13 : vector<128x128xf32>
      %15 = arith.truncf %14 : vector<128x128xf32> to vector<128x128xbf16>
      %c0_13 = arith.constant 0 : index
      %c0_14 = arith.constant 0 : index
      %16 = vector.load %arg5[%c0_13, %c0_14] : memref<128x128xbf16, #tpu.memory_space<vmem>>, vector<128x128xbf16>
      tpu.vector_store %arg5[%c0_13, %c0_14], %15 {strides = array<i32>} : memref<128x128xbf16, #tpu.memory_space<vmem>>, vector<128x128xbf16>,
    } else {
    }
    return
  }
  func.func @transform_0(%arg0: i32, %arg1: i32) -> (i32, i32) {
    %c0_i32 = arith.constant 0 : i32
    return %arg0, %arg1 : i32, i32
  }
  func.func @transform_1(%arg0: i32, %arg1: i32) -> (i32, i32) {
    %c0_i32 = arith.constant 0 : i32
    %c0_i32_0 = arith.constant 0 : i32
    return %arg1, %c0_i32 : i32, i32
  }
  func.func @transform_2(%arg0: i32, %arg1: i32) -> (i32, i32) {
    %c0_i32 = arith.constant 0 : i32
    %c0_i32_0 = arith.constant 0 : i32
    return %arg0, %c0_i32 : i32, i32
  }
  func.func @transform_3(%arg0: i32, %arg1: i32) -> (i32, i32) {
    %c0_i32 = arith.constant 0 : i32
    %c0_i32_0 = arith.constant 0 : i32
    return %arg0, %c0_i32 : i32, i32
  }
}

module attributes {stable_mosaic.version = 11 : i64} {
  func.func @_edge_dot_kernel(%arg0: i32, %arg1: memref<128x128xbf16, #tpu.memory_space<vmem>>, %arg2: memref<128x128xbf16, #tpu.memory_space<vmem>>, %arg3: memref<1x128xf32, #tpu.memory_space<vmem>>) attributes {dimension_semantics = [#tpu.dimension_semantics<parallel>], iteration_bounds = array<i64: 1>, scalar_prefetch = 0 : i64, scratch_operands = 0 : i64, tpu.core_type = #tpu.core_type<tc>, window_params = [{transform_indices = @transform_0, window_bounds = array<i64: 128, 128>}, {transform_indices = @transform_1, window_bounds = array<i64: 128, 128>}, {transform_indices = @transform_2, window_bounds = array<i64: 1, 128>}]} {
    %c0 = arith.constant 0 : index
    %c0_0 = arith.constant 0 : index
    %0 = vector.load %arg1[%c0, %c0_0] : memref<128x128xbf16, #tpu.memory_space<vmem>>, vector<128x128xbf16>
    %c0_1 = arith.constant 0 : index
    %c0_2 = arith.constant 0 : index
    %1 = vector.load %arg2[%c0_1, %c0_2] : memref<128x128xbf16, #tpu.memory_space<vmem>>, vector<128x128xbf16>
    %2 = arith.mulf %0, %1 : vector<128x128xbf16>
    %cst = arith.constant 1.000000e+00 : bf16
    %3 = vector.broadcast %cst : bf16 to vector<1x128xbf16>
    %cst_3 = arith.constant dense<0.000000e+00> : vector<1x128xf32>
    %4 = tpu.matmul %3, %2, %cst_3 {dimension_numbers = #tpu.dot_dimension_numbers<[1], [1], [0], [0], [0, 0, 1, 0], [], []>} : vector<1x128xbf16>, vector<128x128xbf16>, vector<1x128xf32> -> vector<1x128xf32>
    %c0_4 = arith.constant 0 : index
    %c0_5 = arith.constant 0 : index
    %5 = vector.load %arg3[%c0_4, %c0_5] : memref<1x128xf32, #tpu.memory_space<vmem>>, vector<1x128xf32>
    tpu.vector_store %arg3[%c0_4, %c0_5], %4 {strides = array<i32>} : memref<1x128xf32, #tpu.memory_space<vmem>>, vector<1x128xf32>,
    return
  }
  func.func @transform_0(%arg0: i32) -> (i32, i32) {
    %c0_i32 = arith.constant 0 : i32
    %c0_i32_0 = arith.constant 0 : i32
    return %arg0, %c0_i32 : i32, i32
  }
  func.func @transform_1(%arg0: i32) -> (i32, i32) {
    %c0_i32 = arith.constant 0 : i32
    %c0_i32_0 = arith.constant 0 : i32
    return %arg0, %c0_i32 : i32, i32
  }
  func.func @transform_2(%arg0: i32) -> (i32, i32) {
    %c0_i32 = arith.constant 0 : i32
    %c0_i32_0 = arith.constant 0 : i32
    return %c0_i32, %arg0 : i32, i32
  }
}

</mosaic_0001>

<llo_original>
// kernel: graph_rna_forward.7
$region0: #{graph_rna_forward.7}
  #allocation0 [shape = 'u32[]', space=smem, size = 0x4, offset = 0x4, fixed_abs, tag = 'smem constant byte address 0x4 - core index']
  #allocation1 [shape = 'u32[144,128]{1,0:T(1,128)}', space=vmem, size = 0x12000, scoped, tag = 'internal scratch']
  #allocation2 [shape = 'f32[128,128]{1,0:T(8,128)}', space=vmem, size = 0x10000, scoped, tag = 'scratch operand']
  %s0 = inlined_call_operand.vmem [shape: bf16[128,128], index: 0, kind: input, shape index: {}]
  %s1 = inlined_call_operand.vmem [shape: bf16[128,128], index: 1, kind: input, shape index: {}]
  %s2 = inlined_call_operand.vmem [shape: f32[128,128], index: 2, kind: input, shape index: {}]
  %s3 = inlined_call_operand.vmem [shape: bf16[128,128], index: 3, kind: output, shape index: {}]
  %s4 = sld [smem:[#allocation0]]
  $region30: #{graph_rna_forward.7} parent=0
    _
  %s6 = ssub.s32 1, %s4
  %s7 = scalar_select 0, %s6, %s4
  // Predicated region
  $region2: #{graph_rna_forward.7} parent=0 // pred_check
    _
  $region3: #{graph_rna_forward.7} parent=0 // pred_check_branch
    %9 = sbr.rel (0) target = $region5
  $region4: #{graph_rna_forward.7} parent=0 // pred_region
    _
  $region5: #{graph_rna_forward.7} parent=0 // pred_fallthru
    _
  // Predicated region
  $region6: #{graph_rna_forward.7} parent=0 // pred_check
    _
  $region7: #{graph_rna_forward.7} parent=0 // pred_check_branch
    %11 = sbr.rel (0) target = $region9
  $region8: #{graph_rna_forward.7} parent=0 // pred_region
    _
  $region9: #{graph_rna_forward.7} parent=0 // pred_fallthru
    _
  // Predicated region
  $region10: #{graph_rna_forward.7} parent=0 // pred_check
    _
  $region11: #{graph_rna_forward.7} parent=0 // pred_check_branch
    %13 = sbr.rel (0) target = $region13
  $region12: #{graph_rna_forward.7} parent=0 // pred_region
    _
  $region13: #{graph_rna_forward.7} parent=0 // pred_fallthru
    _
  %p15 = scmp.eq.s32.totalorder 0, 0
  // Predicated region
  $region14: #{graph_rna_forward.7} parent=0 // pred_check
    %p16 = pneg %p15
  $region15: #{graph_rna_forward.7} parent=0 // pred_check_branch
    %18 = sbr.rel (%p16) target = $region17
  $region16: #{graph_rna_forward.7} parent=0 // pred_region
    %v19 = vld [vmem:[%s2] sm:$0xff]
    %v20 = vld [vmem:[%s2 + $0x8] sm:$0xff]
    %v21 = vld [vmem:[%s2 + $0x10] sm:$0xff]
    %v22 = vld [vmem:[%s2 + $0x18] sm:$0xff]
    %v23 = vld [vmem:[%s2 + $0x20] sm:$0xff]
    %v24 = vld [vmem:[%s2 + $0x28] sm:$0xff]
    %v25 = vld [vmem:[%s2 + $0x30] sm:$0xff]
    %v26 = vld [vmem:[%s2 + $0x38] sm:$0xff]
    %v27 = vld [vmem:[%s2 + $0x40] sm:$0xff]
    %v28 = vld [vmem:[%s2 + $0x48] sm:$0xff]
    %v29 = vld [vmem:[%s2 + $0x50] sm:$0xff]
    %v30 = vld [vmem:[%s2 + $0x58] sm:$0xff]
    %v31 = vld [vmem:[%s2 + $0x60] sm:$0xff]
    %v32 = vld [vmem:[%s2 + $0x68] sm:$0xff]
    %v33 = vld [vmem:[%s2 + $0x70] sm:$0xff]
    %v34 = vld [vmem:[%s2 + $0x78] sm:$0xff]
    %35 = vst [vmem:[#allocation2] sm:$0xff] %v19
    %36 = vst [vmem:[#allocation2 + $0x8] sm:$0xff] %v20
    %37 = vst [vmem:[#allocation2 + $0x10] sm:$0xff] %v21
    %38 = vst [vmem:[#allocation2 + $0x18] sm:$0xff] %v22
    %39 = vst [vmem:[#allocation2 + $0x20] sm:$0xff] %v23
    %40 = vst [vmem:[#allocation2 + $0x28] sm:$0xff] %v24
    %41 = vst [vmem:[#allocation2 + $0x30] sm:$0xff] %v25
    %42 = vst [vmem:[#allocation2 + $0x38] sm:$0xff] %v26
    %43 = vst [vmem:[#allocation2 + $0x40] sm:$0xff] %v27
    %44 = vst [vmem:[#allocation2 + $0x48] sm:$0xff] %v28
    %45 = vst [vmem:[#allocation2 + $0x50] sm:$0xff] %v29
    %46 = vst [vmem:[#allocation2 + $0x58] sm:$0xff] %v30
    %47 = vst [vmem:[#allocation2 + $0x60] sm:$0xff] %v31
    %48 = vst [vmem:[#allocation2 + $0x68] sm:$0xff] %v32
    %49 = vst [vmem:[#allocation2 + $0x70] sm:$0xff] %v33
    %50 = vst [vmem:[#allocation2 + $0x78] sm:$0xff] %v34
  $region17: #{graph_rna_forward.7} parent=0 // pred_fallthru
    _
  %v51 = vld [vmem:[#allocation2] sm:$0xff]
  %v52 = vld [vmem:[#allocation2 + $0x8] sm:$0xff]
  %v53 = vld [vmem:[#allocation2 + $0x10] sm:$0xff]
  %v54 = vld [vmem:[#allocation2 + $0x18] sm:$0xff]
  %v55 = vld [vmem:[#allocation2 + $0x20] sm:$0xff]
  %v56 = vld [vmem:[#allocation2 + $0x28] sm:$0xff]
  %v57 = vld [vmem:[#allocation2 + $0x30] sm:$0xff]
  %v58 = vld [vmem:[#allocation2 + $0x38] sm:$0xff]
  %v59 = vld [vmem:[#allocation2 + $0x40] sm:$0xff]
  %v60 = vld [vmem:[#allocation2 + $0x48] sm:$0xff]
  %v61 = vld [vmem:[#allocation2 + $0x50] sm:$0xff]
  %v62 = vld [vmem:[#allocation2 + $0x58] sm:$0xff]
  %v63 = vld [vmem:[#allocation2 + $0x60] sm:$0xff]
  %v64 = vld [vmem:[#allocation2 + $0x68] sm:$0xff]
  %v65 = vld [vmem:[#allocation2 + $0x70] sm:$0xff]
  %v66 = vld [vmem:[#allocation2 + $0x78] sm:$0xff]
  %v67 = vld [vmem:[%s0] sm:$0xf]
  %v68 = vld [vmem:[%s0 + $0x4] sm:$0xf]
  %v69 = vld [vmem:[%s0 + $0x8] sm:$0xf]
  %v70 = vld [vmem:[%s0 + $0xc] sm:$0xf]
  %v71 = vld [vmem:[%s0 + $0x10] sm:$0xf]
  %v72 = vld [vmem:[%s0 + $0x14] sm:$0xf]
  %v73 = vld [vmem:[%s0 + $0x18] sm:$0xf]
  %v74 = vld [vmem:[%s0 + $0x1c] sm:$0xf]
  %v75 = vld [vmem:[%s0 + $0x20] sm:$0xf]
  %v76 = vld [vmem:[%s0 + $0x24] sm:$0xf]
  %v77 = vld [vmem:[%s0 + $0x28] sm:$0xf]
  %v78 = vld [vmem:[%s0 + $0x2c] sm:$0xf]
  %v79 = vld [vmem:[%s0 + $0x30] sm:$0xf]
  %v80 = vld [vmem:[%s0 + $0x34] sm:$0xf]
  %v81 = vld [vmem:[%s0 + $0x38] sm:$0xf]
  %v82 = vld [vmem:[%s0 + $0x3c] sm:$0xf]
  %v83 = vld [vmem:[%s1] sm:$0xf]
  %v84 = vld [vmem:[%s1 + $0x4] sm:$0xf]
  %v85 = vld [vmem:[%s1 + $0x8] sm:$0xf]
  %v86 = vld [vmem:[%s1 + $0xc] sm:$0xf]
  %v87 = vld [vmem:[%s1 + $0x10] sm:$0xf]
  %v88 = vld [vmem:[%s1 + $0x14] sm:$0xf]
  %v89 = vld [vmem:[%s1 + $0x18] sm:$0xf]
  %v90 = vld [vmem:[%s1 + $0x1c] sm:$0xf]
  %v91 = vld [vmem:[%s1 + $0x20] sm:$0xf]
  %v92 = vld [vmem:[%s1 + $0x24] sm:$0xf]
  %v93 = vld [vmem:[%s1 + $0x28] sm:$0xf]
  %v94 = vld [vmem:[%s1 + $0x2c] sm:$0xf]
  %v95 = vld [vmem:[%s1 + $0x30] sm:$0xf]
  %v96 = vld [vmem:[%s1 + $0x34] sm:$0xf]
  %v97 = vld [vmem:[%s1 + $0x38] sm:$0xf]
  %v98 = vld [vmem:[%s1 + $0x3c] sm:$0xf]
  %v115 = vunpack.c.l.b16 %v67
  %v116 = vunpack.c.l.b16 %v68
  %v117 = vunpack.c.l.b16 %v69
  %v118 = vunpack.c.l.b16 %v70
  %v119 = vunpack.c.l.b16 %v71
  %v120 = vunpack.c.l.b16 %v72
  %v121 = vunpack.c.l.b16 %v73
  %v122 = vunpack.c.l.b16 %v74
  %v123 = vunpack.c.l.b16 %v75
  %v124 = vunpack.c.l.b16 %v76
  %v125 = vunpack.c.l.b16 %v77
  %v126 = vunpack.c.l.b16 %v78
  %v127 = vunpack.c.l.b16 %v79
  %v128 = vunpack.c.l.b16 %v80
  %v129 = vunpack.c.l.b16 %v81
  %v130 = vunpack.c.l.b16 %v82
  %v131 = vpack.c.b16 %v116, %v115
  %v132 = vpack.c.b16 %v118, %v117
  %v133 = vpack.c.b16 %v120, %v119
  %v134 = vpack.c.b16 %v122, %v121
  %v135 = vpack.c.b16 %v124, %v123
  %v136 = vpack.c.b16 %v126, %v125
  %v137 = vpack.c.b16 %v128, %v127
  %v138 = vpack.c.b16 %v130, %v129
  %v163 = vunpack.c.l.b16 %v83
  %v164 = vunpack.c.l.b16 %v84
  %v165 = vunpack.c.l.b16 %v85
  %v166 = vunpack.c.l.b16 %v86
  %v167 = vunpack.c.l.b16 %v87
  %v168 = vunpack.c.l.b16 %v88
  %v169 = vunpack.c.l.b16 %v89
  %v170 = vunpack.c.l.b16 %v90
  %v171 = vunpack.c.l.b16 %v91
  %v172 = vunpack.c.l.b16 %v92
  %v173 = vunpack.c.l.b16 %v93
  %v174 = vunpack.c.l.b16 %v94
  %v175 = vunpack.c.l.b16 %v95
  %v176 = vunpack.c.l.b16 %v96
  %v177 = vunpack.c.l.b16 %v97
  %v178 = vunpack.c.l.b16 %v98
  %v179 = vpack.c.b16 %v164, %v163
  %v180 = vpack.c.b16 %v166, %v165
  %v181 = vpack.c.b16 %v168, %v167
  %v182 = vpack.c.b16 %v170, %v169
  %v183 = vpack.c.b16 %v172, %v171
  %v184 = vpack.c.b16 %v174, %v173
  %v185 = vpack.c.b16 %v176, %v175
  %v186 = vpack.c.b16 %v178, %v177
  %195 = vmatprep.subr.bf16.mxu0 0
  %196 = vmatpush1.bf16.msra.mxu0 %v179
  %197 = vmatprep.subr.bf16.mxu0 0
  %198 = vmatpush1.bf16.msra.mxu0 %v180
  %199 = vmatprep.subr.bf16.mxu0 0
  %200 = vmatpush1.bf16.msra.mxu0 %v181
  %201 = vmatprep.subr.bf16.mxu0 0
  %202 = vmatpush1.bf16.msra.mxu0 %v182
  %203 = vmatprep.subr.bf16.mxu0 0
  %204 = vmatpush1.bf16.msra.mxu0 %v183
  %205 = vmatprep.subr.bf16.mxu0 0
  %206 = vmatpush1.bf16.msra.mxu0 %v184
  %207 = vmatprep.subr.bf16.mxu0 0
  %208 = vmatpush1.bf16.msra.mxu0 %v185
  %209 = vmatprep.subr.bf16.mxu0 0
  %210 = vmatpush1.bf16.msra.mxu0 %v186
  %211 = vmatprep.subr.bf16.mxu0 0
  %212 = vmatpush1.bf16.msra.mxu0 0
  %213 = vmatprep.subr.bf16.mxu0 0
  %214 = vmatpush1.bf16.msra.mxu0 0
  %215 = vmatprep.subr.bf16.mxu0 0
  %216 = vmatpush1.bf16.msra.mxu0 0
  %217 = vmatprep.subr.bf16.mxu0 0
  %218 = vmatpush1.bf16.msra.mxu0 0
  %219 = vmatprep.subr.bf16.mxu0 0
  %220 = vmatpush1.bf16.msra.mxu0 0
  %221 = vmatprep.subr.bf16.mxu0 0
  %222 = vmatpush1.bf16.msra.mxu0 0
  %223 = vmatprep.subr.bf16.mxu0 0
  %224 = vmatpush1.bf16.msra.mxu0 0
  %225 = vmatprep.subr.bf16.mxu0 0
  %226 = vmatpush1.bf16.msra.mxu0 0
  %227 = vmatprep.mubr.bf16.mxu0 0
  %228 = vmatmul.mubr.bf16.gmra.mrb[0].mxu0 %v131
  %v229 = vpop.f32.mrb[0].mxu0
  %v230 = vadd.f32 0.0, %v229
  %v231 = vpop.f32.mrb[0].mxu0
  %v232 = vpop.f32.mrb[0].mxu0
  %v233 = vadd.f32 0.0, %v232
  %v234 = vpop.f32.mrb[0].mxu0
  %235 = vmatprep.mubr.bf16.mxu0 0
  %236 = vmatmul.mubr.bf16.gmra.mrb[0].mxu0 %v132
  %v237 = vpop.f32.mrb[0].mxu0
  %v238 = vadd.f32 0.0, %v237
  %v239 = vpop.f32.mrb[0].mxu0
  %v240 = vpop.f32.mrb[0].mxu0
  %v241 = vadd.f32 0.0, %v240
  %v242 = vpop.f32.mrb[0].mxu0
  %243 = vmatprep.mubr.bf16.mxu0 0
  %244 = vmatmul.mubr.bf16.gmra.mrb[0].mxu0 %v133
  %v245 = vpop.f32.mrb[0].mxu0
  %v246 = vadd.f32 0.0, %v245
  %v247 = vpop.f32.mrb[0].mxu0
  %v248 = vpop.f32.mrb[0].mxu0
  %v249 = vadd.f32 0.0, %v248
  %v250 = vpop.f32.mrb[0].mxu0
  %251 = vmatprep.mubr.bf16.mxu0 0
  %252 = vmatmul.mubr.bf16.gmra.mrb[0].mxu0 %v134
  %v253 = vpop.f32.mrb[0].mxu0
  %v254 = vadd.f32 0.0, %v253
  %v255 = vpop.f32.mrb[0].mxu0
  %v256 = vpop.f32.mrb[0].mxu0
  %v257 = vadd.f32 0.0, %v256
  %v258 = vpop.f32.mrb[0].mxu0
  %259 = vmatprep.mubr.bf16.mxu0 0
  %260 = vmatmul.mubr.bf16.gmra.mrb[0].mxu0 %v135
  %v261 = vpop.f32.mrb[0].mxu0
  %v262 = vadd.f32 0.0, %v261
  %v263 = vpop.f32.mrb[0].mxu0
  %v264 = vpop.f32.mrb[0].mxu0
  %v265 = vadd.f32 0.0, %v264
  %v266 = vpop.f32.mrb[0].mxu0
  %267 = vmatprep.mubr.bf16.mxu0 0
  %268 = vmatmul.mubr.bf16.gmra.mrb[0].mxu0 %v136
  %v269 = vpop.f32.mrb[0].mxu0
  %v270 = vadd.f32 0.0, %v269
  %v271 = vpop.f32.mrb[0].mxu0
  %v272 = vpop.f32.mrb[0].mxu0
  %v273 = vadd.f32 0.0, %v272
  %v274 = vpop.f32.mrb[0].mxu0
  %275 = vmatprep.mubr.bf16.mxu0 0
  %276 = vmatmul.mubr.bf16.gmra.mrb[0].mxu0 %v137
  %v277 = vpop.f32.mrb[0].mxu0
  %v278 = vadd.f32 0.0, %v277
  %v279 = vpop.f32.mrb[0].mxu0
  %v280 = vpop.f32.mrb[0].mxu0
  %v281 = vadd.f32 0.0, %v280
  %v282 = vpop.f32.mrb[0].mxu0
  %283 = vmatprep.mubr.bf16.mxu0 0
  %284 = vmatmul.mubr.bf16.gmra.mrb[0].mxu0 %v138
  %v285 = vpop.f32.mrb[0].mxu0
  %v286 = vadd.f32 0.0, %v285
  %v287 = vpop.f32.mrb[0].mxu0
  %v288 = vpop.f32.mrb[0].mxu0
  %v289 = vadd.f32 0.0, %v288
  %v290 = vpop.f32.mrb[0].mxu0
  %291 = vdwg.mxu0
  %v292 = vadd.f32 %v51, %v230
  %v293 = vadd.f32 %v52, %v233
  %v294 = vadd.f32 %v53, %v238
  %v295 = vadd.f32 %v54, %v241
  %v296 = vadd.f32 %v55, %v246
  %v297 = vadd.f32 %v56, %v249
  %v298 = vadd.f32 %v57, %v254
  %v299 = vadd.f32 %v58, %v257
  %v300 = vadd.f32 %v59, %v262
  %v301 = vadd.f32 %v60, %v265
  %v302 = vadd.f32 %v61, %v270
  %v303 = vadd.f32 %v62, %v273
  %v304 = vadd.f32 %v63, %v278
  %v305 = vadd.f32 %v64, %v281
  %v306 = vadd.f32 %v65, %v286
  %v307 = vadd.f32 %v66, %v289
  %308 = vst [vmem:[#allocation2] sm:$0xff] %v292
  %309 = vst [vmem:[#allocation2 + $0x8] sm:$0xff] %v293
  %310 = vst [vmem:[#allocation2 + $0x10] sm:$0xff] %v294
  %311 = vst [vmem:[#allocation2 + $0x18] sm:$0xff] %v295
  %312 = vst [vmem:[#allocation2 + $0x20] sm:$0xff] %v296
  %313 = vst [vmem:[#allocation2 + $0x28] sm:$0xff] %v297
  %314 = vst [vmem:[#allocation2 + $0x30] sm:$0xff] %v298
  %315 = vst [vmem:[#allocation2 + $0x38] sm:$0xff] %v299
  %316 = vst [vmem:[#allocation2 + $0x40] sm:$0xff] %v300
  %317 = vst [vmem:[#allocation2 + $0x48] sm:$0xff] %v301
  %318 = vst [vmem:[#allocation2 + $0x50] sm:$0xff] %v302
  %319 = vst [vmem:[#allocation2 + $0x58] sm:$0xff] %v303
  %320 = vst [vmem:[#allocation2 + $0x60] sm:$0xff] %v304
  %321 = vst [vmem:[#allocation2 + $0x68] sm:$0xff] %v305
  %322 = vst [vmem:[#allocation2 + $0x70] sm:$0xff] %v306
  %323 = vst [vmem:[#allocation2 + $0x78] sm:$0xff] %v307
  // Predicated region
  $region18: #{graph_rna_forward.7} parent=0 // pred_check
    %p324 = pneg %p15
  $region19: #{graph_rna_forward.7} parent=0 // pred_check_branch
    %326 = sbr.rel (%p324) target = $region21
  $region20: #{graph_rna_forward.7} parent=0 // pred_region
    %v327 = vld [vmem:[#allocation2] sm:$0xff]
    %v328 = vld [vmem:[#allocation2 + $0x8] sm:$0xff]
    %v329 = vld [vmem:[#allocation2 + $0x10] sm:$0xff]
    %v330 = vld [vmem:[#allocation2 + $0x18] sm:$0xff]
    %v331 = vld [vmem:[#allocation2 + $0x20] sm:$0xff]
    %v332 = vld [vmem:[#allocation2 + $0x28] sm:$0xff]
    %v333 = vld [vmem:[#allocation2 + $0x30] sm:$0xff]
    %v334 = vld [vmem:[#allocation2 + $0x38] sm:$0xff]
    %v335 = vld [vmem:[#allocation2 + $0x40] sm:$0xff]
    %v336 = vld [vmem:[#allocation2 + $0x48] sm:$0xff]
    %v337 = vld [vmem:[#allocation2 + $0x50] sm:$0xff]
    %v338 = vld [vmem:[#allocation2 + $0x58] sm:$0xff]
    %v339 = vld [vmem:[#allocation2 + $0x60] sm:$0xff]
    %v340 = vld [vmem:[#allocation2 + $0x68] sm:$0xff]
    %v341 = vld [vmem:[#allocation2 + $0x70] sm:$0xff]
    %v342 = vld [vmem:[#allocation2 + $0x78] sm:$0xff]
    %v343 = vmax.f32 %v327, 0.0
    %v344 = vmax.f32 %v328, 0.0
    %v345 = vmax.f32 %v329, 0.0
    %v346 = vmax.f32 %v330, 0.0
    %v347 = vmax.f32 %v331, 0.0
    %v348 = vmax.f32 %v332, 0.0
    %v349 = vmax.f32 %v333, 0.0
    %v350 = vmax.f32 %v334, 0.0
    %v351 = vmax.f32 %v335, 0.0
    %v352 = vmax.f32 %v336, 0.0
    %v353 = vmax.f32 %v337, 0.0
    %v354 = vmax.f32 %v338, 0.0
    %v355 = vmax.f32 %v339, 0.0
    %v356 = vmax.f32 %v340, 0.0
    %v357 = vmax.f32 %v341, 0.0
    %v358 = vmax.f32 %v342, 0.0
    %v359 = vpack.c.bf16 %v344, %v343
    %v360 = vpack.c.bf16 %v346, %v345
    %v361 = vpack.c.bf16 %v348, %v347
    %v362 = vpack.c.bf16 %v350, %v349
    %v363 = vpack.c.bf16 %v352, %v351
    %v364 = vpack.c.bf16 %v354, %v353
    %v365 = vpack.c.bf16 %v356, %v355
    %v366 = vpack.c.bf16 %v358, %v357
    %367 = vst [vmem:[%s3] sm:$0xff] %v359
    %368 = vst [vmem:[%s3 + $0x8] sm:$0xff] %v360
    %369 = vst [vmem:[%s3 + $0x10] sm:$0xff] %v361
    %370 = vst [vmem:[%s3 + $0x18] sm:$0xff] %v362
    %371 = vst [vmem:[%s3 + $0x20] sm:$0xff] %v363
    %372 = vst [vmem:[%s3 + $0x28] sm:$0xff] %v364
    %373 = vst [vmem:[%s3 + $0x30] sm:$0xff] %v365
    %374 = vst [vmem:[%s3 + $0x38] sm:$0xff] %v366
  $region21: #{graph_rna_forward.7} parent=0 // pred_fallthru
    _
  // Predicated region
  $region22: #{graph_rna_forward.7} parent=0 // pred_check
    _
  $region23: #{graph_rna_forward.7} parent=0 // pred_check_branch
    %376 = sbr.rel (0) target = $region25
  $region24: #{graph_rna_forward.7} parent=0 // pred_region
    _
  $region25: #{graph_rna_forward.7} parent=0 // pred_fallthru
    _
  // Predicated region
  $region26: #{graph_rna_forward.7} parent=0 // pred_check
    _
  $region27: #{graph_rna_forward.7} parent=0 // pred_check_branch
    %378 = sbr.rel (0) target = $region29
  $region28: #{graph_rna_forward.7} parent=0 // pred_region
    _
  $region29: #{graph_rna_forward.7} parent=0 // pred_fallthru
    _

// kernel: graph_rna_forward.6
$region0: #{graph_rna_forward.6}
  #allocation0 [shape = 'u32[]', space=smem, size = 0x4, offset = 0x4, fixed_abs, tag = 'smem constant byte address 0x4 - core index']
  #allocation1 [shape = 'u32[144,128]{1,0:T(1,128)}', space=vmem, size = 0x12000, scoped, tag = 'internal scratch']
  #allocation2 [shape = 'f32[128,128]{1,0:T(8,128)}', space=vmem, size = 0x10000, scoped, tag = 'scratch operand']
  %s0 = inlined_call_operand.vmem [shape: bf16[128,512], index: 0, kind: input, shape index: {}]
  %s1 = inlined_call_operand.vmem [shape: bf16[512,128], index: 1, kind: input, shape index: {}]
  %s2 = inlined_call_operand.vmem [shape: f32[128,128], index: 2, kind: input, shape index: {}]
  %s3 = inlined_call_operand.vmem [shape: bf16[128,128], index: 3, kind: output, shape index: {}]
  %s4 = sld [smem:[#allocation0]]
  $region30: #{graph_rna_forward.6} parent=0
    _
  %s6 = ssub.s32 1, %s4
  %s7 = scalar_select 0, %s6, %s4
  // Predicated region
  $region2: #{graph_rna_forward.6} parent=0 // pred_check
    _
  $region3: #{graph_rna_forward.6} parent=0 // pred_check_branch
    %9 = sbr.rel (0) target = $region5
  $region4: #{graph_rna_forward.6} parent=0 // pred_region
    _
  $region5: #{graph_rna_forward.6} parent=0 // pred_fallthru
    _
  // Predicated region
  $region6: #{graph_rna_forward.6} parent=0 // pred_check
    _
  $region7: #{graph_rna_forward.6} parent=0 // pred_check_branch
    %11 = sbr.rel (0) target = $region9
  $region8: #{graph_rna_forward.6} parent=0 // pred_region
    _
  $region9: #{graph_rna_forward.6} parent=0 // pred_fallthru
    _
  // Predicated region
  $region10: #{graph_rna_forward.6} parent=0 // pred_check
    _
  $region11: #{graph_rna_forward.6} parent=0 // pred_check_branch
    %13 = sbr.rel (0) target = $region13
  $region12: #{graph_rna_forward.6} parent=0 // pred_region
    _
  $region13: #{graph_rna_forward.6} parent=0 // pred_fallthru
    _
  %p15 = scmp.eq.s32.totalorder 0, 0
  // Predicated region
  $region14: #{graph_rna_forward.6} parent=0 // pred_check
    %p16 = pneg %p15
  $region15: #{graph_rna_forward.6} parent=0 // pred_check_branch
    %18 = sbr.rel (%p16) target = $region17
  $region16: #{graph_rna_forward.6} parent=0 // pred_region
    %v19 = vld [vmem:[%s2] sm:$0xff]
    %v20 = vld [vmem:[%s2 + $0x8] sm:$0xff]
    %v21 = vld [vmem:[%s2 + $0x10] sm:$0xff]
    %v22 = vld [vmem:[%s2 + $0x18] sm:$0xff]
    %v23 = vld [vmem:[%s2 + $0x20] sm:$0xff]
    %v24 = vld [vmem:[%s2 + $0x28] sm:$0xff]
    %v25 = vld [vmem:[%s2 + $0x30] sm:$0xff]
    %v26 = vld [vmem:[%s2 + $0x38] sm:$0xff]
    %v27 = vld [vmem:[%s2 + $0x40] sm:$0xff]
    %v28 = vld [vmem:[%s2 + $0x48] sm:$0xff]
    %v29 = vld [vmem:[%s2 + $0x50] sm:$0xff]
    %v30 = vld [vmem:[%s2 + $0x58] sm:$0xff]
    %v31 = vld [vmem:[%s2 + $0x60] sm:$0xff]
    %v32 = vld [vmem:[%s2 + $0x68] sm:$0xff]
    %v33 = vld [vmem:[%s2 + $0x70] sm:$0xff]
    %v34 = vld [vmem:[%s2 + $0x78] sm:$0xff]
    %35 = vst [vmem:[#allocation2] sm:$0xff] %v19
    %36 = vst [vmem:[#allocation2 + $0x8] sm:$0xff] %v20
    %37 = vst [vmem:[#allocation2 + $0x10] sm:$0xff] %v21
    %38 = vst [vmem:[#allocation2 + $0x18] sm:$0xff] %v22
    %39 = vst [vmem:[#allocation2 + $0x20] sm:$0xff] %v23
    %40 = vst [vmem:[#allocation2 + $0x28] sm:$0xff] %v24
    %41 = vst [vmem:[#allocation2 + $0x30] sm:$0xff] %v25
    %42 = vst [vmem:[#allocation2 + $0x38] sm:$0xff] %v26
    %43 = vst [vmem:[#allocation2 + $0x40] sm:$0xff] %v27
    %44 = vst [vmem:[#allocation2 + $0x48] sm:$0xff] %v28
    %45 = vst [vmem:[#allocation2 + $0x50] sm:$0xff] %v29
    %46 = vst [vmem:[#allocation2 + $0x58] sm:$0xff] %v30
    %47 = vst [vmem:[#allocation2 + $0x60] sm:$0xff] %v31
    %48 = vst [vmem:[#allocation2 + $0x68] sm:$0xff] %v32
    %49 = vst [vmem:[#allocation2 + $0x70] sm:$0xff] %v33
    %50 = vst [vmem:[#allocation2 + $0x78] sm:$0xff] %v34
  $region17: #{graph_rna_forward.6} parent=0 // pred_fallthru
    _
  %v51 = vld [vmem:[#allocation2] sm:$0xff]
  %v52 = vld [vmem:[#allocation2 + $0x8] sm:$0xff]
  %v53 = vld [vmem:[#allocation2 + $0x10] sm:$0xff]
  %v54 = vld [vmem:[#allocation2 + $0x18] sm:$0xff]
  %v55 = vld [vmem:[#allocation2 + $0x20] sm:$0xff]
  %v56 = vld [vmem:[#allocation2 + $0x28] sm:$0xff]
  %v57 = vld [vmem:[#allocation2 + $0x30] sm:$0xff]
  %v58 = vld [vmem:[#allocation2 + $0x38] sm:$0xff]
  %v59 = vld [vmem:[#allocation2 + $0x40] sm:$0xff]
  %v60 = vld [vmem:[#allocation2 + $0x48] sm:$0xff]
  %v61 = vld [vmem:[#allocation2 + $0x50] sm:$0xff]
  %v62 = vld [vmem:[#allocation2 + $0x58] sm:$0xff]
  %v63 = vld [vmem:[#allocation2 + $0x60] sm:$0xff]
  %v64 = vld [vmem:[#allocation2 + $0x68] sm:$0xff]
  %v65 = vld [vmem:[#allocation2 + $0x70] sm:$0xff]
  %v66 = vld [vmem:[#allocation2 + $0x78] sm:$0xff]
  %v67 = vld [vmem:[%s0] sm:$0xff]
  %v68 = vld [vmem:[%s0 + $0x8] sm:$0xff]
  %v69 = vld [vmem:[%s0 + $0x10] sm:$0xff]
  %v70 = vld [vmem:[%s0 + $0x18] sm:$0xff]
  %v71 = vld [vmem:[%s0 + $0x20] sm:$0xff]
  %v72 = vld [vmem:[%s0 + $0x28] sm:$0xff]
  %v73 = vld [vmem:[%s0 + $0x30] sm:$0xff]
  %v74 = vld [vmem:[%s0 + $0x38] sm:$0xff]
  %v75 = vld [vmem:[%s0 + $0x40] sm:$0xff]
  %v76 = vld [vmem:[%s0 + $0x48] sm:$0xff]
  %v77 = vld [vmem:[%s0 + $0x50] sm:$0xff]
  %v78 = vld [vmem:[%s0 + $0x58] sm:$0xff]
  %v79 = vld [vmem:[%s0 + $0x60] sm:$0xff]
  %v80 = vld [vmem:[%s0 + $0x68] sm:$0xff]
  %v81 = vld [vmem:[%s0 + $0x70] sm:$0xff]
  %v82 = vld [vmem:[%s0 + $0x78] sm:$0xff]
  %v83 = vld [vmem:[%s0 + $0x80] sm:$0xff]
  %v84 = vld [vmem:[%s0 + $0x88] sm:$0xff]
  %v85 = vld [vmem:[%s0 + $0x90] sm:$0xff]
  %v86 = vld [vmem:[%s0 + $0x98] sm:$0xff]
  %v87 = vld [vmem:[%s0 + $0xa0] sm:$0xff]
  %v88 = vld [vmem:[%s0 + $0xa8] sm:$0xff]
  %v89 = vld [vmem:[%s0 + $0xb0] sm:$0xff]
  %v90 = vld [vmem:[%s0 + $0xb8] sm:$0xff]
  %v91 = vld [vmem:[%s0 + $0xc0] sm:$0xff]
  %v92 = vld [vmem:[%s0 + $0xc8] sm:$0xff]
  %v93 = vld [vmem:[%s0 + $0xd0] sm:$0xff]
  %v94 = vld [vmem:[%s0 + $0xd8] sm:$0xff]
  %v95 = vld [vmem:[%s0 + $0xe0] sm:$0xff]
  %v96 = vld [vmem:[%s0 + $0xe8] sm:$0xff]
  %v97 = vld [vmem:[%s0 + $0xf0] sm:$0xff]
  %v98 = vld [vmem:[%s0 + $0xf8] sm:$0xff]
  %v99 = vld [vmem:[%s1] sm:$0xf]
  %v100 = vld [vmem:[%s1 + $0x4] sm:$0xf]
  %v101 = vld [vmem:[%s1 + $0x8] sm:$0xf]
  %v102 = vld [vmem:[%s1 + $0xc] sm:$0xf]
  %v103 = vld [vmem:[%s1 + $0x10] sm:$0xf]
  %v104 = vld [vmem:[%s1 + $0x14] sm:$0xf]
  %v105 = vld [vmem:[%s1 + $0x18] sm:$0xf]
  %v106 = vld [vmem:[%s1 + $0x1c] sm:$0xf]
  %v107 = vld [vmem:[%s1 + $0x20] sm:$0xf]
  %v108 = vld [vmem:[%s1 + $0x24] sm:$0xf]
  %v109 = vld [vmem:[%s1 + $0x28] sm:$0xf]
  %v110 = vld [vmem:[%s1 + $0x2c] sm:$0xf]
  %v111 = vld [vmem:[%s1 + $0x30] sm:$0xf]
  %v112 = vld [vmem:[%s1 + $0x34] sm:$0xf]
  %v113 = vld [vmem:[%s1 + $0x38] sm:$0xf]
  %v114 = vld [vmem:[%s1 + $0x3c] sm:$0xf]
  %v115 = vld [vmem:[%s1 + $0x40] sm:$0xf]
  %v116 = vld [vmem:[%s1 + $0x44] sm:$0xf]
  %v117 = vld [vmem:[%s1 + $0x48] sm:$0xf]
  %v118 = vld [vmem:[%s1 + $0x4c] sm:$0xf]
  %v119 = vld [vmem:[%s1 + $0x50] sm:$0xf]
  %v120 = vld [vmem:[%s1 + $0x54] sm:$0xf]
  %v121 = vld [vmem:[%s1 + $0x58] sm:$0xf]
  %v122 = vld [vmem:[%s1 + $0x5c] sm:$0xf]
  %v123 = vld [vmem:[%s1 + $0x60] sm:$0xf]
  %v124 = vld [vmem:[%s1 + $0x64] sm:$0xf]
  %v125 = vld [vmem:[%s1 + $0x68] sm:$0xf]
  %v126 = vld [vmem:[%s1 + $0x6c] sm:$0xf]
  %v127 = vld [vmem:[%s1 + $0x70] sm:$0xf]
  %v128 = vld [vmem:[%s1 + $0x74] sm:$0xf]
  %v129 = vld [vmem:[%s1 + $0x78] sm:$0xf]
  %v130 = vld [vmem:[%s1 + $0x7c] sm:$0xf]
  %v131 = vld [vmem:[%s1 + $0x80] sm:$0xf]
  %v132 = vld [vmem:[%s1 + $0x84] sm:$0xf]
  %v133 = vld [vmem:[%s1 + $0x88] sm:$0xf]
  %v134 = vld [vmem:[%s1 + $0x8c] sm:$0xf]
  %v135 = vld [vmem:[%s1 + $0x90] sm:$0xf]
  %v136 = vld [vmem:[%s1 + $0x94] sm:$0xf]
  %v137 = vld [vmem:[%s1 + $0x98] sm:$0xf]
  %v138 = vld [vmem:[%s1 + $0x9c] sm:$0xf]
  %v139 = vld [vmem:[%s1 + $0xa0] sm:$0xf]
  %v140 = vld [vmem:[%s1 + $0xa4] sm:$0xf]
  %v141 = vld [vmem:[%s1 + $0xa8] sm:$0xf]
  %v142 = vld [vmem:[%s1 + $0xac] sm:$0xf]
  %v143 = vld [vmem:[%s1 + $0xb0] sm:$0xf]
  %v144 = vld [vmem:[%s1 + $0xb4] sm:$0xf]
  %v145 = vld [vmem:[%s1 + $0xb8] sm:$0xf]
  %v146 = vld [vmem:[%s1 + $0xbc] sm:$0xf]
  %v147 = vld [vmem:[%s1 + $0xc0] sm:$0xf]
  %v148 = vld [vmem:[%s1 + $0xc4] sm:$0xf]
  %v149 = vld [vmem:[%s1 + $0xc8] sm:$0xf]
  %v150 = vld [vmem:[%s1 + $0xcc] sm:$0xf]
  %v151 = vld [vmem:[%s1 + $0xd0] sm:$0xf]
  %v152 = vld [vmem:[%s1 + $0xd4] sm:$0xf]
  %v153 = vld [vmem:[%s1 + $0xd8] sm:$0xf]
  %v154 = vld [vmem:[%s1 + $0xdc] sm:$0xf]
  %v155 = vld [vmem:[%s1 + $0xe0] sm:$0xf]
  %v156 = vld [vmem:[%s1 + $0xe4] sm:$0xf]
  %v157 = vld [vmem:[%s1 + $0xe8] sm:$0xf]
  %v158 = vld [vmem:[%s1 + $0xec] sm:$0xf]
  %v159 = vld [vmem:[%s1 + $0xf0] sm:$0xf]
  %v160 = vld [vmem:[%s1 + $0xf4] sm:$0xf]
  %v161 = vld [vmem:[%s1 + $0xf8] sm:$0xf]
  %v162 = vld [vmem:[%s1 + $0xfc] sm:$0xf]
  %v195 = vunpack.c.l.b16 %v67
  %v196 = vunpack.c.h.b16 %v67
  %v197 = vunpack.c.l.b16 %v68
  %v198 = vunpack.c.h.b16 %v68
  %v199 = vunpack.c.l.b16 %v69
  %v200 = vunpack.c.h.b16 %v69
  %v201 = vunpack.c.l.b16 %v70
  %v202 = vunpack.c.h.b16 %v70
  %v203 = vunpack.c.l.b16 %v71
  %v204 = vunpack.c.h.b16 %v71
  %v205 = vunpack.c.l.b16 %v72
  %v206 = vunpack.c.h.b16 %v72
  %v207 = vunpack.c.l.b16 %v73
  %v208 = vunpack.c.h.b16 %v73
  %v209 = vunpack.c.l.b16 %v74
  %v210 = vunpack.c.h.b16 %v74
  %v211 = vunpack.c.l.b16 %v75
  %v212 = vunpack.c.h.b16 %v75
  %v213 = vunpack.c.l.b16 %v76
  %v214 = vunpack.c.h.b16 %v76
  %v215 = vunpack.c.l.b16 %v77
  %v216 = vunpack.c.h.b16 %v77
  %v217 = vunpack.c.l.b16 %v78
  %v218 = vunpack.c.h.b16 %v78
  %v219 = vunpack.c.l.b16 %v79
  %v220 = vunpack.c.h.b16 %v79
  %v221 = vunpack.c.l.b16 %v80
  %v222 = vunpack.c.h.b16 %v80
  %v223 = vunpack.c.l.b16 %v81
  %v224 = vunpack.c.h.b16 %v81
  %v225 = vunpack.c.l.b16 %v82
  %v226 = vunpack.c.h.b16 %v82
  %v227 = vunpack.c.l.b16 %v83
  %v228 = vunpack.c.h.b16 %v83
  %v229 = vunpack.c.l.b16 %v84
  %v230 = vunpack.c.h.b16 %v84
  %v231 = vunpack.c.l.b16 %v85
  %v232 = vunpack.c.h.b16 %v85
  %v233 = vunpack.c.l.b16 %v86
  %v234 = vunpack.c.h.b16 %v86
  %v235 = vunpack.c.l.b16 %v87
  %v236 = vunpack.c.h.b16 %v87
  %v237 = vunpack.c.l.b16 %v88
  %v238 = vunpack.c.h.b16 %v88
  %v239 = vunpack.c.l.b16 %v89
  %v240 = vunpack.c.h.b16 %v89
  %v241 = vunpack.c.l.b16 %v90
  %v242 = vunpack.c.h.b16 %v90
  %v243 = vunpack.c.l.b16 %v91
  %v244 = vunpack.c.h.b16 %v91
  %v245 = vunpack.c.l.b16 %v92
  %v246 = vunpack.c.h.b16 %v92
  %v247 = vunpack.c.l.b16 %v93
  %v248 = vunpack.c.h.b16 %v93
  %v249 = vunpack.c.l.b16 %v94
  %v250 = vunpack.c.h.b16 %v94
  %v251 = vunpack.c.l.b16 %v95
  %v252 = vunpack.c.h.b16 %v95
  %v253 = vunpack.c.l.b16 %v96
  %v254 = vunpack.c.h.b16 %v96
  %v255 = vunpack.c.l.b16 %v97
  %v256 = vunpack.c.h.b16 %v97
  %v257 = vunpack.c.l.b16 %v98
  %v258 = vunpack.c.h.b16 %v98
  %v259 = vpack.c.b16 %v199, %v195
  %v260 = vpack.c.b16 %v200, %v196
  %v261 = vpack.c.b16 %v201, %v197
  %v262 = vpack.c.b16 %v202, %v198
  %v263 = vpack.c.b16 %v207, %v203
  %v264 = vpack.c.b16 %v208, %v204
  %v265 = vpack.c.b16 %v209, %v205
  %v266 = vpack.c.b16 %v210, %v206
  %v267 = vpack.c.b16 %v215, %v211
  %v268 = vpack.c.b16 %v216, %v212
  %v269 = vpack.c.b16 %v217, %v213
  %v270 = vpack.c.b16 %v218, %v214
  %v271 = vpack.c.b16 %v223, %v219
  %v272 = vpack.c.b16 %v224, %v220
  %v273 = vpack.c.b16 %v225, %v221
  %v274 = vpack.c.b16 %v226, %v222
  %v275 = vpack.c.b16 %v231, %v227
  %v276 = vpack.c.b16 %v232, %v228
  %v277 = vpack.c.b16 %v233, %v229
  %v278 = vpack.c.b16 %v234, %v230
  %v279 = vpack.c.b16 %v239, %v235
  %v280 = vpack.c.b16 %v240, %v236
  %v281 = vpack.c.b16 %v241, %v237
  %v282 = vpack.c.b16 %v242, %v238
  %v283 = vpack.c.b16 %v247, %v243
  %v284 = vpack.c.b16 %v248, %v244
  %v285 = vpack.c.b16 %v249, %v245
  %v286 = vpack.c.b16 %v250, %v246
  %v287 = vpack.c.b16 %v255, %v251
  %v288 = vpack.c.b16 %v256, %v252
  %v289 = vpack.c.b16 %v257, %v253
  %v290 = vpack.c.b16 %v258, %v254
  %v387 = vunpack.c.l.b16 %v99
  %v388 = vunpack.c.l.b16 %v100
  %v389 = vunpack.c.l.b16 %v101
  %v390 = vunpack.c.l.b16 %v102
  %v391 = vunpack.c.l.b16 %v103
  %v392 = vunpack.c.l.b16 %v104
  %v393 = vunpack.c.l.b16 %v105
  %v394 = vunpack.c.l.b16 %v106
  %v395 = vunpack.c.l.b16 %v107
  %v396 = vunpack.c.l.b16 %v108
  %v397 = vunpack.c.l.b16 %v109
  %v398 = vunpack.c.l.b16 %v110
  %v399 = vunpack.c.l.b16 %v111
  %v400 = vunpack.c.l.b16 %v112
  %v401 = vunpack.c.l.b16 %v113
  %v402 = vunpack.c.l.b16 %v114
  %v403 = vunpack.c.l.b16 %v115
  %v404 = vunpack.c.l.b16 %v116
  %v405 = vunpack.c.l.b16 %v117
  %v406 = vunpack.c.l.b16 %v118
  %v407 = vunpack.c.l.b16 %v119
  %v408 = vunpack.c.l.b16 %v120
  %v409 = vunpack.c.l.b16 %v121
  %v410 = vunpack.c.l.b16 %v122
  %v411 = vunpack.c.l.b16 %v123
  %v412 = vunpack.c.l.b16 %v124
  %v413 = vunpack.c.l.b16 %v125
  %v414 = vunpack.c.l.b16 %v126
  %v415 = vunpack.c.l.b16 %v127
  %v416 = vunpack.c.l.b16 %v128
  %v417 = vunpack.c.l.b16 %v129
  %v418 = vunpack.c.l.b16 %v130
  %v419 = vunpack.c.l.b16 %v131
  %v420 = vunpack.c.l.b16 %v132
  %v421 = vunpack.c.l.b16 %v133
  %v422 = vunpack.c.l.b16 %v134
  %v423 = vunpack.c.l.b16 %v135
  %v424 = vunpack.c.l.b16 %v136
  %v425 = vunpack.c.l.b16 %v137
  %v426 = vunpack.c.l.b16 %v138
  %v427 = vunpack.c.l.b16 %v139
  %v428 = vunpack.c.l.b16 %v140
  %v429 = vunpack.c.l.b16 %v141
  %v430 = vunpack.c.l.b16 %v142
  %v431 = vunpack.c.l.b16 %v143
  %v432 = vunpack.c.l.b16 %v144
  %v433 = vunpack.c.l.b16 %v145
  %v434 = vunpack.c.l.b16 %v146
  %v435 = vunpack.c.l.b16 %v147
  %v436 = vunpack.c.l.b16 %v148
  %v437 = vunpack.c.l.b16 %v149
  %v438 = vunpack.c.l.b16 %v150
  %v439 = vunpack.c.l.b16 %v151
  %v440 = vunpack.c.l.b16 %v152
  %v441 = vunpack.c.l.b16 %v153
  %v442 = vunpack.c.l.b16 %v154
  %v443 = vunpack.c.l.b16 %v155
  %v444 = vunpack.c.l.b16 %v156
  %v445 = vunpack.c.l.b16 %v157
  %v446 = vunpack.c.l.b16 %v158
  %v447 = vunpack.c.l.b16 %v159
  %v448 = vunpack.c.l.b16 %v160
  %v449 = vunpack.c.l.b16 %v161
  %v450 = vunpack.c.l.b16 %v162
  %v451 = vpack.c.b16 %v388, %v387
  %v452 = vpack.c.b16 %v390, %v389
  %v453 = vpack.c.b16 %v392, %v391
  %v454 = vpack.c.b16 %v394, %v393
  %v455 = vpack.c.b16 %v396, %v395
  %v456 = vpack.c.b16 %v398, %v397
  %v457 = vpack.c.b16 %v400, %v399
  %v458 = vpack.c.b16 %v402, %v401
  %v459 = vpack.c.b16 %v404, %v403
  %v460 = vpack.c.b16 %v406, %v405
  %v461 = vpack.c.b16 %v408, %v407
  %v462 = vpack.c.b16 %v410, %v409
  %v463 = vpack.c.b16 %v412, %v411
  %v464 = vpack.c.b16 %v414, %v413
  %v465 = vpack.c.b16 %v416, %v415
  %v466 = vpack.c.b16 %v418, %v417
  %v467 = vpack.c.b16 %v420, %v419
  %v468 = vpack.c.b16 %v422, %v421
  %v469 = vpack.c.b16 %v424, %v423
  %v470 = vpack.c.b16 %v426, %v425
  %v471 = vpack.c.b16 %v428, %v427
  %v472 = vpack.c.b16 %v430, %v429
  %v473 = vpack.c.b16 %v432, %v431
  %v474 = vpack.c.b16 %v434, %v433
  %v475 = vpack.c.b16 %v436, %v435
  %v476 = vpack.c.b16 %v438, %v437
  %v477 = vpack.c.b16 %v440, %v439
  %v478 = vpack.c.b16 %v442, %v441
  %v479 = vpack.c.b16 %v444, %v443
  %v480 = vpack.c.b16 %v446, %v445
  %v481 = vpack.c.b16 %v448, %v447
  %v482 = vpack.c.b16 %v450, %v449
  %515 = vmatprep.subr.bf16.mxu0 0
  %516 = vmatpush1.bf16.msra.mxu0 %v451
  %517 = vmatprep.subr.bf16.mxu0 0
  %518 = vmatpush1.bf16.msra.mxu0 %v452
  %519 = vmatprep.subr.bf16.mxu0 0
  %520 = vmatpush1.bf16.msra.mxu0 %v453
  %521 = vmatprep.subr.bf16.mxu0 0
  %522 = vmatpush1.bf16.msra.mxu0 %v454
  %523 = vmatprep.subr.bf16.mxu0 0
  %524 = vmatpush1.bf16.msra.mxu0 %v455
  %525 = vmatprep.subr.bf16.mxu0 0
  %526 = vmatpush1.bf16.msra.mxu0 %v456
  %527 = vmatprep.subr.bf16.mxu0 0
  %528 = vmatpush1.bf16.msra.mxu0 %v457
  %529 = vmatprep.subr.bf16.mxu0 0
  %530 = vmatpush1.bf16.msra.mxu0 %v458
  %531 = vmatprep.subr.bf16.mxu0 0
  %532 = vmatpush1.bf16.msra.mxu0 %v459
  %533 = vmatprep.subr.bf16.mxu0 0
  %534 = vmatpush1.bf16.msra.mxu0 %v460
  %535 = vmatprep.subr.bf16.mxu0 0
  %536 = vmatpush1.bf16.msra.mxu0 %v461
  %537 = vmatprep.subr.bf16.mxu0 0
  %538 = vmatpush1.bf16.msra.mxu0 %v462
  %539 = vmatprep.subr.bf16.mxu0 0
  %540 = vmatpush1.bf16.msra.mxu0 %v463
  %541 = vmatprep.subr.bf16.mxu0 0
  %542 = vmatpush1.bf16.msra.mxu0 %v464
  %543 = vmatprep.subr.bf16.mxu0 0
  %544 = vmatpush1.bf16.msra.mxu0 %v465
  %545 = vmatprep.subr.bf16.mxu0 0
  %546 = vmatpush1.bf16.msra.mxu0 %v466
  %547 = vmatprep.mubr.bf16.mxu0 %v260
  %548 = vmatmul.mubr.bf16.gmra.mrb[0].mxu0 %v259
  %v549 = vpop.f32.mrb[0].mxu0
  %v550 = vadd.f32 0.0, %v549
  %v551 = vpop.f32.mrb[0].mxu0
  %v552 = vpop.f32.mrb[0].mxu0
  %v553 = vadd.f32 0.0, %v552
  %v554 = vpop.f32.mrb[0].mxu0
  %555 = vmatprep.mubr.bf16.mxu0 %v264
  %556 = vmatmul.mubr.bf16.gmra.mrb[0].mxu0 %v263
  %v557 = vpop.f32.mrb[0].mxu0
  %v558 = vadd.f32 0.0, %v557
  %v559 = vpop.f32.mrb[0].mxu0
  %v560 = vpop.f32.mrb[0].mxu0
  %v561 = vadd.f32 0.0, %v560
  %v562 = vpop.f32.mrb[0].mxu0
  %563 = vmatprep.mubr.bf16.mxu0 %v268
  %564 = vmatmul.mubr.bf16.gmra.mrb[0].mxu0 %v267
  %v565 = vpop.f32.mrb[0].mxu0
  %v566 = vadd.f32 0.0, %v565
  %v567 = vpop.f32.mrb[0].mxu0
  %v568 = vpop.f32.mrb[0].mxu0
  %v569 = vadd.f32 0.0, %v568
  %v570 = vpop.f32.mrb[0].mxu0
  %571 = vmatprep.mubr.bf16.mxu0 %v272
  %572 = vmatmul.mubr.bf16.gmra.mrb[0].mxu0 %v271
  %v573 = vpop.f32.mrb[0].mxu0
  %v574 = vadd.f32 0.0, %v573
  %v575 = vpop.f32.mrb[0].mxu0
  %v576 = vpop.f32.mrb[0].mxu0
  %v577 = vadd.f32 0.0, %v576
  %v578 = vpop.f32.mrb[0].mxu0
  %579 = vmatprep.mubr.bf16.mxu0 %v276
  %580 = vmatmul.mubr.bf16.gmra.mrb[0].mxu0 %v275
  %v581 = vpop.f32.mrb[0].mxu0
  %v582 = vadd.f32 0.0, %v581
  %v583 = vpop.f32.mrb[0].mxu0
  %v584 = vpop.f32.mrb[0].mxu0
  %v585 = vadd.f32 0.0, %v584
  %v586 = vpop.f32.mrb[0].mxu0
  %587 = vmatprep.mubr.bf16.mxu0 %v280
  %588 = vmatmul.mubr.bf16.gmra.mrb[0].mxu0 %v279
  %v589 = vpop.f32.mrb[0].mxu0
  %v590 = vadd.f32 0.0, %v589
  %v591 = vpop.f32.mrb[0].mxu0
  %v592 = vpop.f32.mrb[0].mxu0
  %v593 = vadd.f32 0.0, %v592
  %v594 = vpop.f32.mrb[0].mxu0
  %595 = vmatprep.mubr.bf16.mxu0 %v284
  %596 = vmatmul.mubr.bf16.gmra.mrb[0].mxu0 %v283
  %v597 = vpop.f32.mrb[0].mxu0
  %v598 = vadd.f32 0.0, %v597
  %v599 = vpop.f32.mrb[0].mxu0
  %v600 = vpop.f32.mrb[0].mxu0
  %v601 = vadd.f32 0.0, %v600
  %v602 = vpop.f32.mrb[0].mxu0
  %603 = vmatprep.mubr.bf16.mxu0 %v288
  %604 = vmatmul.mubr.bf16.gmra.mrb[0].mxu0 %v287
  %v605 = vpop.f32.mrb[0].mxu0
  %v606 = vadd.f32 0.0, %v605
  %v607 = vpop.f32.mrb[0].mxu0
  %v608 = vpop.f32.mrb[0].mxu0
  %v609 = vadd.f32 0.0, %v608
  %v610 = vpop.f32.mrb[0].mxu0
  %611 = vdwg.mxu0
  %612 = vmatprep.subr.bf16.mxu0 0
  %613 = vmatpush1.bf16.msra.mxu0 %v467
  %614 = vmatprep.subr.bf16.mxu0 0
  %615 = vmatpush1.bf16.msra.mxu0 %v468
  %616 = vmatprep.subr.bf16.mxu0 0
  %617 = vmatpush1.bf16.msra.mxu0 %v469
  %618 = vmatprep.subr.bf16.mxu0 0
  %619 = vmatpush1.bf16.msra.mxu0 %v470
  %620 = vmatprep.subr.bf16.mxu0 0
  %621 = vmatpush1.bf16.msra.mxu0 %v471
  %622 = vmatprep.subr.bf16.mxu0 0
  %623 = vmatpush1.bf16.msra.mxu0 %v472
  %624 = vmatprep.subr.bf16.mxu0 0
  %625 = vmatpush1.bf16.msra.mxu0 %v473
  %626 = vmatprep.subr.bf16.mxu0 0
  %627 = vmatpush1.bf16.msra.mxu0 %v474
  %628 = vmatprep.subr.bf16.mxu0 0
  %629 = vmatpush1.bf16.msra.mxu0 %v475
  %630 = vmatprep.subr.bf16.mxu0 0
  %631 = vmatpush1.bf16.msra.mxu0 %v476
  %632 = vmatprep.subr.bf16.mxu0 0
  %633 = vmatpush1.bf16.msra.mxu0 %v477
  %634 = vmatprep.subr.bf16.mxu0 0
  %635 = vmatpush1.bf16.msra.mxu0 %v478
  %636 = vmatprep.subr.bf16.mxu0 0
  %637 = vmatpush1.bf16.msra.mxu0 %v479
  %638 = vmatprep.subr.bf16.mxu0 0
  %639 = vmatpush1.bf16.msra.mxu0 %v480
  %640 = vmatprep.subr.bf16.mxu0 0
  %641 = vmatpush1.bf16.msra.mxu0 %v481
  %642 = vmatprep.subr.bf16.mxu0 0
  %643 = vmatpush1.bf16.msra.mxu0 %v482
  %644 = vmatprep.mubr.bf16.mxu0 %v262
  %645 = vmatmul.mubr.bf16.gmra.mrb[0].mxu0 %v261
  %v646 = vpop.f32.mrb[0].mxu0
  %v647 = vadd.f32 %v550, %v646
  %v648 = vpop.f32.mrb[0].mxu0
  %v649 = vpop.f32.mrb[0].mxu0
  %v650 = vadd.f32 %v553, %v649
  %v651 = vpop.f32.mrb[0].mxu0
  %652 = vmatprep.mubr.bf16.mxu0 %v266
  %653 = vmatmul.mubr.bf16.gmra.mrb[0].mxu0 %v265
  %v654 = vpop.f32.mrb[0].mxu0
  %v655 = vadd.f32 %v558, %v654
  %v656 = vpop.f32.mrb[0].mxu0
  %v657 = vpop.f32.mrb[0].mxu0
  %v658 = vadd.f32 %v561, %v657
  %v659 = vpop.f32.mrb[0].mxu0
  %660 = vmatprep.mubr.bf16.mxu0 %v270
  %661 = vmatmul.mubr.bf16.gmra.mrb[0].mxu0 %v269
  %v662 = vpop.f32.mrb[0].mxu0
  %v663 = vadd.f32 %v566, %v662
  %v664 = vpop.f32.mrb[0].mxu0
  %v665 = vpop.f32.mrb[0].mxu0
  %v666 = vadd.f32 %v569, %v665
  %v667 = vpop.f32.mrb[0].mxu0
  %668 = vmatprep.mubr.bf16.mxu0 %v274
  %669 = vmatmul.mubr.bf16.gmra.mrb[0].mxu0 %v273
  %v670 = vpop.f32.mrb[0].mxu0
  %v671 = vadd.f32 %v574, %v670
  %v672 = vpop.f32.mrb[0].mxu0
  %v673 = vpop.f32.mrb[0].mxu0
  %v674 = vadd.f32 %v577, %v673
  %v675 = vpop.f32.mrb[0].mxu0
  %676 = vmatprep.mubr.bf16.mxu0 %v278
  %677 = vmatmul.mubr.bf16.gmra.mrb[0].mxu0 %v277
  %v678 = vpop.f32.mrb[0].mxu0
  %v679 = vadd.f32 %v582, %v678
  %v680 = vpop.f32.mrb[0].mxu0
  %v681 = vpop.f32.mrb[0].mxu0
  %v682 = vadd.f32 %v585, %v681
  %v683 = vpop.f32.mrb[0].mxu0
  %684 = vmatprep.mubr.bf16.mxu0 %v282
  %685 = vmatmul.mubr.bf16.gmra.mrb[0].mxu0 %v281
  %v686 = vpop.f32.mrb[0].mxu0
  %v687 = vadd.f32 %v590, %v686
  %v688 = vpop.f32.mrb[0].mxu0
  %v689 = vpop.f32.mrb[0].mxu0
  %v690 = vadd.f32 %v593, %v689
  %v691 = vpop.f32.mrb[0].mxu0
  %692 = vmatprep.mubr.bf16.mxu0 %v286
  %693 = vmatmul.mubr.bf16.gmra.mrb[0].mxu0 %v285
  %v694 = vpop.f32.mrb[0].mxu0
  %v695 = vadd.f32 %v598, %v694
  %v696 = vpop.f32.mrb[0].mxu0
  %v697 = vpop.f32.mrb[0].mxu0
  %v698 = vadd.f32 %v601, %v697
  %v699 = vpop.f32.mrb[0].mxu0
  %700 = vmatprep.mubr.bf16.mxu0 %v290
  %701 = vmatmul.mubr.bf16.gmra.mrb[0].mxu0 %v289
  %v702 = vpop.f32.mrb[0].mxu0
  %v703 = vadd.f32 %v606, %v702
  %v704 = vpop.f32.mrb[0].mxu0
  %v705 = vpop.f32.mrb[0].mxu0
  %v706 = vadd.f32 %v609, %v705
  %v707 = vpop.f32.mrb[0].mxu0
  %708 = vdwg.mxu0
  %v709 = vadd.f32 %v51, %v647
  %v710 = vadd.f32 %v52, %v650
  %v711 = vadd.f32 %v53, %v655
  %v712 = vadd.f32 %v54, %v658
  %v713 = vadd.f32 %v55, %v663
  %v714 = vadd.f32 %v56, %v666
  %v715 = vadd.f32 %v57, %v671
  %v716 = vadd.f32 %v58, %v674
  %v717 = vadd.f32 %v59, %v679
  %v718 = vadd.f32 %v60, %v682
  %v719 = vadd.f32 %v61, %v687
  %v720 = vadd.f32 %v62, %v690
  %v721 = vadd.f32 %v63, %v695
  %v722 = vadd.f32 %v64, %v698
  %v723 = vadd.f32 %v65, %v703
  %v724 = vadd.f32 %v66, %v706
  %725 = vst [vmem:[#allocation2] sm:$0xff] %v709
  %726 = vst [vmem:[#allocation2 + $0x8] sm:$0xff] %v710
  %727 = vst [vmem:[#allocation2 + $0x10] sm:$0xff] %v711
  %728 = vst [vmem:[#allocation2 + $0x18] sm:$0xff] %v712
  %729 = vst [vmem:[#allocation2 + $0x20] sm:$0xff] %v713
  %730 = vst [vmem:[#allocation2 + $0x28] sm:$0xff] %v714
  %731 = vst [vmem:[#allocation2 + $0x30] sm:$0xff] %v715
  %732 = vst [vmem:[#allocation2 + $0x38] sm:$0xff] %v716
  %733 = vst [vmem:[#allocation2 + $0x40] sm:$0xff] %v717
  %734 = vst [vmem:[#allocation2 + $0x48] sm:$0xff] %v718
  %735 = vst [vmem:[#allocation2 + $0x50] sm:$0xff] %v719
  %736 = vst [vmem:[#allocation2 + $0x58] sm:$0xff] %v720
  %737 = vst [vmem:[#allocation2 + $0x60] sm:$0xff] %v721
  %738 = vst [vmem:[#allocation2 + $0x68] sm:$0xff] %v722
  %739 = vst [vmem:[#allocation2 + $0x70] sm:$0xff] %v723
  %740 = vst [vmem:[#allocation2 + $0x78] sm:$0xff] %v724
  // Predicated region
  $region18: #{graph_rna_forward.6} parent=0 // pred_check
    %p741 = pneg %p15
  $region19: #{graph_rna_forward.6} parent=0 // pred_check_branch
    %743 = sbr.rel (%p741) target = $region21
  $region20: #{graph_rna_forward.6} parent=0 // pred_region
    %v744 = vld [vmem:[#allocation2] sm:$0xff]
    %v745 = vld [vmem:[#allocation2 + $0x8] sm:$0xff]
    %v746 = vld [vmem:[#allocation2 + $0x10] sm:$0xff]
    %v747 = vld [vmem:[#allocation2 + $0x18] sm:$0xff]
    %v748 = vld [vmem:[#allocation2 + $0x20] sm:$0xff]
    %v749 = vld [vmem:[#allocation2 + $0x28] sm:$0xff]
    %v750 = vld [vmem:[#allocation2 + $0x30] sm:$0xff]
    %v751 = vld [vmem:[#allocation2 + $0x38] sm:$0xff]
    %v752 = vld [vmem:[#allocation2 + $0x40] sm:$0xff]
    %v753 = vld [vmem:[#allocation2 + $0x48] sm:$0xff]
    %v754 = vld [vmem:[#allocation2 + $0x50] sm:$0xff]
    %v755 = vld [vmem:[#allocation2 + $0x58] sm:$0xff]
    %v756 = vld [vmem:[#allocation2 + $0x60] sm:$0xff]
    %v757 = vld [vmem:[#allocation2 + $0x68] sm:$0xff]
    %v758 = vld [vmem:[#allocation2 + $0x70] sm:$0xff]
    %v759 = vld [vmem:[#allocation2 + $0x78] sm:$0xff]
    %v760 = vmax.f32 %v744, 0.0
    %v761 = vmax.f32 %v745, 0.0
    %v762 = vmax.f32 %v746, 0.0
    %v763 = vmax.f32 %v747, 0.0
    %v764 = vmax.f32 %v748, 0.0
    %v765 = vmax.f32 %v749, 0.0
    %v766 = vmax.f32 %v750, 0.0
    %v767 = vmax.f32 %v751, 0.0
    %v768 = vmax.f32 %v752, 0.0
    %v769 = vmax.f32 %v753, 0.0
    %v770 = vmax.f32 %v754, 0.0
    %v771 = vmax.f32 %v755, 0.0
    %v772 = vmax.f32 %v756, 0.0
    %v773 = vmax.f32 %v757, 0.0
    %v774 = vmax.f32 %v758, 0.0
    %v775 = vmax.f32 %v759, 0.0
    %v776 = vpack.c.bf16 %v761, %v760
    %v777 = vpack.c.bf16 %v763, %v762
    %v778 = vpack.c.bf16 %v765, %v764
    %v779 = vpack.c.bf16 %v767, %v766
    %v780 = vpack.c.bf16 %v769, %v768
    %v781 = vpack.c.bf16 %v771, %v770
    %v782 = vpack.c.bf16 %v773, %v772
    %v783 = vpack.c.bf16 %v775, %v774
    %784 = vst [vmem:[%s3] sm:$0xff] %v776
    %785 = vst [vmem:[%s3 + $0x8] sm:$0xff] %v777
    %786 = vst [vmem:[%s3 + $0x10] sm:$0xff] %v778
    %787 = vst [vmem:[%s3 + $0x18] sm:$0xff] %v779
    %788 = vst [vmem:[%s3 + $0x20] sm:$0xff] %v780
    %789 = vst [vmem:[%s3 + $0x28] sm:$0xff] %v781
    %790 = vst [vmem:[%s3 + $0x30] sm:$0xff] %v782
    %791 = vst [vmem:[%s3 + $0x38] sm:$0xff] %v783
  $region21: #{graph_rna_forward.6} parent=0 // pred_fallthru
    _
  // Predicated region
  $region22: #{graph_rna_forward.6} parent=0 // pred_check
    _
  $region23: #{graph_rna_forward.6} parent=0 // pred_check_branch
    %793 = sbr.rel (0) target = $region25
  $region24: #{graph_rna_forward.6} parent=0 // pred_region
    _
  $region25: #{graph_rna_forward.6} parent=0 // pred_fallthru
    _
  // Predicated region
  $region26: #{graph_rna_forward.6} parent=0 // pred_check
    _
  $region27: #{graph_rna_forward.6} parent=0 // pred_check_branch
    %795 = sbr.rel (0) target = $region29
  $region28: #{graph_rna_forward.6} parent=0 // pred_region
    _
  $region29: #{graph_rna_forward.6} parent=0 // pred_fallthru
    _

// kernel: graph_rna_forward.9
$region0: #{graph_rna_forward.9}
  #allocation0 [shape = 'u32[]', space=smem, size = 0x4, offset = 0x4, fixed_abs, tag = 'smem constant byte address 0x4 - core index']
  #allocation1 [shape = 'u32[144,128]{1,0:T(1,128)}', space=vmem, size = 0x12000, scoped, tag = 'internal scratch']
  #allocation2 [shape = 'f32[128,128]{1,0:T(8,128)}', space=vmem, size = 0x10000, scoped, tag = 'scratch operand']
  %s0 = inlined_call_operand.vmem [shape: bf16[128,512], index: 0, kind: input, shape index: {}]
  %s1 = inlined_call_operand.vmem [shape: bf16[512,128], index: 1, kind: input, shape index: {}]
  %s2 = inlined_call_operand.vmem [shape: f32[128,128], index: 2, kind: input, shape index: {}]
  %s3 = inlined_call_operand.vmem [shape: bf16[128,128], index: 3, kind: output, shape index: {}]
  %s4 = sld [smem:[#allocation0]]
  $region30: #{graph_rna_forward.9} parent=0
    _
  %s6 = ssub.s32 1, %s4
  %s7 = scalar_select 0, %s6, %s4
  // Predicated region
  $region2: #{graph_rna_forward.9} parent=0 // pred_check
    _
  $region3: #{graph_rna_forward.9} parent=0 // pred_check_branch
    %9 = sbr.rel (0) target = $region5
  $region4: #{graph_rna_forward.9} parent=0 // pred_region
    _
  $region5: #{graph_rna_forward.9} parent=0 // pred_fallthru
    _
  // Predicated region
  $region6: #{graph_rna_forward.9} parent=0 // pred_check
    _
  $region7: #{graph_rna_forward.9} parent=0 // pred_check_branch
    %11 = sbr.rel (0) target = $region9
  $region8: #{graph_rna_forward.9} parent=0 // pred_region
    _
  $region9: #{graph_rna_forward.9} parent=0 // pred_fallthru
    _
  // Predicated region
  $region10: #{graph_rna_forward.9} parent=0 // pred_check
    _
  $region11: #{graph_rna_forward.9} parent=0 // pred_check_branch
    %13 = sbr.rel (0) target = $region13
  $region12: #{graph_rna_forward.9} parent=0 // pred_region
    _
  $region13: #{graph_rna_forward.9} parent=0 // pred_fallthru
    _
  %p15 = scmp.eq.s32.totalorder 0, 0
  // Predicated region
  $region14: #{graph_rna_forward.9} parent=0 // pred_check
    %p16 = pneg %p15
  $region15: #{graph_rna_forward.9} parent=0 // pred_check_branch
    %18 = sbr.rel (%p16) target = $region17
  $region16: #{graph_rna_forward.9} parent=0 // pred_region
    %v19 = vld [vmem:[%s2] sm:$0xff]
    %v20 = vld [vmem:[%s2 + $0x8] sm:$0xff]
    %v21 = vld [vmem:[%s2 + $0x10] sm:$0xff]
    %v22 = vld [vmem:[%s2 + $0x18] sm:$0xff]
    %v23 = vld [vmem:[%s2 + $0x20] sm:$0xff]
    %v24 = vld [vmem:[%s2 + $0x28] sm:$0xff]
    %v25 = vld [vmem:[%s2 + $0x30] sm:$0xff]
    %v26 = vld [vmem:[%s2 + $0x38] sm:$0xff]
    %v27 = vld [vmem:[%s2 + $0x40] sm:$0xff]
    %v28 = vld [vmem:[%s2 + $0x48] sm:$0xff]
    %v29 = vld [vmem:[%s2 + $0x50] sm:$0xff]
    %v30 = vld [vmem:[%s2 + $0x58] sm:$0xff]
    %v31 = vld [vmem:[%s2 + $0x60] sm:$0xff]
    %v32 = vld [vmem:[%s2 + $0x68] sm:$0xff]
    %v33 = vld [vmem:[%s2 + $0x70] sm:$0xff]
    %v34 = vld [vmem:[%s2 + $0x78] sm:$0xff]
    %35 = vst [vmem:[#allocation2] sm:$0xff] %v19
    %36 = vst [vmem:[#allocation2 + $0x8] sm:$0xff] %v20
    %37 = vst [vmem:[#allocation2 + $0x10] sm:$0xff] %v21
    %38 = vst [vmem:[#allocation2 + $0x18] sm:$0xff] %v22
    %39 = vst [vmem:[#allocation2 + $0x20] sm:$0xff] %v23
    %40 = vst [vmem:[#allocation2 + $0x28] sm:$0xff] %v24
    %41 = vst [vmem:[#allocation2 + $0x30] sm:$0xff] %v25
    %42 = vst [vmem:[#allocation2 + $0x38] sm:$0xff] %v26
    %43 = vst [vmem:[#allocation2 + $0x40] sm:$0xff] %v27
    %44 = vst [vmem:[#allocation2 + $0x48] sm:$0xff] %v28
    %45 = vst [vmem:[#allocation2 + $0x50] sm:$0xff] %v29
    %46 = vst [vmem:[#allocation2 + $0x58] sm:$0xff] %v30
    %47 = vst [vmem:[#allocation2 + $0x60] sm:$0xff] %v31
    %48 = vst [vmem:[#allocation2 + $0x68] sm:$0xff] %v32
    %49 = vst [vmem:[#allocation2 + $0x70] sm:$0xff] %v33
    %50 = vst [vmem:[#allocation2 + $0x78] sm:$0xff] %v34
  $region17: #{graph_rna_forward.9} parent=0 // pred_fallthru
    _
  %v51 = vld [vmem:[#allocation2] sm:$0xff]
  %v52 = vld [vmem:[#allocation2 + $0x8] sm:$0xff]
  %v53 = vld [vmem:[#allocation2 + $0x10] sm:$0xff]
  %v54 = vld [vmem:[#allocation2 + $0x18] sm:$0xff]
  %v55 = vld [vmem:[#allocation2 + $0x20] sm:$0xff]
  %v56 = vld [vmem:[#allocation2 + $0x28] sm:$0xff]
  %v57 = vld [vmem:[#allocation2 + $0x30] sm:$0xff]
  %v58 = vld [vmem:[#allocation2 + $0x38] sm:$0xff]
  %v59 = vld [vmem:[#allocation2 + $0x40] sm:$0xff]
  %v60 = vld [vmem:[#allocation2 + $0x48] sm:$0xff]
  %v61 = vld [vmem:[#allocation2 + $0x50] sm:$0xff]
  %v62 = vld [vmem:[#allocation2 + $0x58] sm:$0xff]
  %v63 = vld [vmem:[#allocation2 + $0x60] sm:$0xff]
  %v64 = vld [vmem:[#allocation2 + $0x68] sm:$0xff]
  %v65 = vld [vmem:[#allocation2 + $0x70] sm:$0xff]
  %v66 = vld [vmem:[#allocation2 + $0x78] sm:$0xff]
  %v67 = vld [vmem:[%s0] sm:$0xff]
  %v68 = vld [vmem:[%s0 + $0x8] sm:$0xff]
  %v69 = vld [vmem:[%s0 + $0x10] sm:$0xff]
  %v70 = vld [vmem:[%s0 + $0x18] sm:$0xff]
  %v71 = vld [vmem:[%s0 + $0x20] sm:$0xff]
  %v72 = vld [vmem:[%s0 + $0x28] sm:$0xff]
  %v73 = vld [vmem:[%s0 + $0x30] sm:$0xff]
  %v74 = vld [vmem:[%s0 + $0x38] sm:$0xff]
  %v75 = vld [vmem:[%s0 + $0x40] sm:$0xff]
  %v76 = vld [vmem:[%s0 + $0x48] sm:$0xff]
  %v77 = vld [vmem:[%s0 + $0x50] sm:$0xff]
  %v78 = vld [vmem:[%s0 + $0x58] sm:$0xff]
  %v79 = vld [vmem:[%s0 + $0x60] sm:$0xff]
  %v80 = vld [vmem:[%s0 + $0x68] sm:$0xff]
  %v81 = vld [vmem:[%s0 + $0x70] sm:$0xff]
  %v82 = vld [vmem:[%s0 + $0x78] sm:$0xff]
  %v83 = vld [vmem:[%s0 + $0x80] sm:$0xff]
  %v84 = vld [vmem:[%s0 + $0x88] sm:$0xff]
  %v85 = vld [vmem:[%s0 + $0x90] sm:$0xff]
  %v86 = vld [vmem:[%s0 + $0x98] sm:$0xff]
  %v87 = vld [vmem:[%s0 + $0xa0] sm:$0xff]
  %v88 = vld [vmem:[%s0 + $0xa8] sm:$0xff]
  %v89 = vld [vmem:[%s0 + $0xb0] sm:$0xff]
  %v90 = vld [vmem:[%s0 + $0xb8] sm:$0xff]
  %v91 = vld [vmem:[%s0 + $0xc0] sm:$0xff]
  %v92 = vld [vmem:[%s0 + $0xc8] sm:$0xff]
  %v93 = vld [vmem:[%s0 + $0xd0] sm:$0xff]
  %v94 = vld [vmem:[%s0 + $0xd8] sm:$0xff]
  %v95 = vld [vmem:[%s0 + $0xe0] sm:$0xff]
  %v96 = vld [vmem:[%s0 + $0xe8] sm:$0xff]
  %v97 = vld [vmem:[%s0 + $0xf0] sm:$0xff]
  %v98 = vld [vmem:[%s0 + $0xf8] sm:$0xff]
  %v99 = vld [vmem:[%s1] sm:$0xf]
  %v100 = vld [vmem:[%s1 + $0x4] sm:$0xf]
  %v101 = vld [vmem:[%s1 + $0x8] sm:$0xf]
  %v102 = vld [vmem:[%s1 + $0xc] sm:$0xf]
  %v103 = vld [vmem:[%s1 + $0x10] sm:$0xf]
  %v104 = vld [vmem:[%s1 + $0x14] sm:$0xf]
  %v105 = vld [vmem:[%s1 + $0x18] sm:$0xf]
  %v106 = vld [vmem:[%s1 + $0x1c] sm:$0xf]
  %v107 = vld [vmem:[%s1 + $0x20] sm:$0xf]
  %v108 = vld [vmem:[%s1 + $0x24] sm:$0xf]
  %v109 = vld [vmem:[%s1 + $0x28] sm:$0xf]
  %v110 = vld [vmem:[%s1 + $0x2c] sm:$0xf]
  %v111 = vld [vmem:[%s1 + $0x30] sm:$0xf]
  %v112 = vld [vmem:[%s1 + $0x34] sm:$0xf]
  %v113 = vld [vmem:[%s1 + $0x38] sm:$0xf]
  %v114 = vld [vmem:[%s1 + $0x3c] sm:$0xf]
  %v115 = vld [vmem:[%s1 + $0x40] sm:$0xf]
  %v116 = vld [vmem:[%s1 + $0x44] sm:$0xf]
  %v117 = vld [vmem:[%s1 + $0x48] sm:$0xf]
  %v118 = vld [vmem:[%s1 + $0x4c] sm:$0xf]
  %v119 = vld [vmem:[%s1 + $0x50] sm:$0xf]
  %v120 = vld [vmem:[%s1 + $0x54] sm:$0xf]
  %v121 = vld [vmem:[%s1 + $0x58] sm:$0xf]
  %v122 = vld [vmem:[%s1 + $0x5c] sm:$0xf]
  %v123 = vld [vmem:[%s1 + $0x60] sm:$0xf]
  %v124 = vld [vmem:[%s1 + $0x64] sm:$0xf]
  %v125 = vld [vmem:[%s1 + $0x68] sm:$0xf]
  %v126 = vld [vmem:[%s1 + $0x6c] sm:$0xf]
  %v127 = vld [vmem:[%s1 + $0x70] sm:$0xf]
  %v128 = vld [vmem:[%s1 + $0x74] sm:$0xf]
  %v129 = vld [vmem:[%s1 + $0x78] sm:$0xf]
  %v130 = vld [vmem:[%s1 + $0x7c] sm:$0xf]
  %v131 = vld [vmem:[%s1 + $0x80] sm:$0xf]
  %v132 = vld [vmem:[%s1 + $0x84] sm:$0xf]
  %v133 = vld [vmem:[%s1 + $0x88] sm:$0xf]
  %v134 = vld [vmem:[%s1 + $0x8c] sm:$0xf]
  %v135 = vld [vmem:[%s1 + $0x90] sm:$0xf]
  %v136 = vld [vmem:[%s1 + $0x94] sm:$0xf]
  %v137 = vld [vmem:[%s1 + $0x98] sm:$0xf]
  %v138 = vld [vmem:[%s1 + $0x9c] sm:$0xf]
  %v139 = vld [vmem:[%s1 + $0xa0] sm:$0xf]
  %v140 = vld [vmem:[%s1 + $0xa4] sm:$0xf]
  %v141 = vld [vmem:[%s1 + $0xa8] sm:$0xf]
  %v142 = vld [vmem:[%s1 + $0xac] sm:$0xf]
  %v143 = vld [vmem:[%s1 + $0xb0] sm:$0xf]
  %v144 = vld [vmem:[%s1 + $0xb4] sm:$0xf]
  %v145 = vld [vmem:[%s1 + $0xb8] sm:$0xf]
  %v146 = vld [vmem:[%s1 + $0xbc] sm:$0xf]
  %v147 = vld [vmem:[%s1 + $0xc0] sm:$0xf]
  %v148 = vld [vmem:[%s1 + $0xc4] sm:$0xf]
  %v149 = vld [vmem:[%s1 + $0xc8] sm:$0xf]
  %v150 = vld [vmem:[%s1 + $0xcc] sm:$0xf]
  %v151 = vld [vmem:[%s1 + $0xd0] sm:$0xf]
  %v152 = vld [vmem:[%s1 + $0xd4] sm:$0xf]
  %v153 = vld [vmem:[%s1 + $0xd8] sm:$0xf]
  %v154 = vld [vmem:[%s1 + $0xdc] sm:$0xf]
  %v155 = vld [vmem:[%s1 + $0xe0] sm:$0xf]
  %v156 = vld [vmem:[%s1 + $0xe4] sm:$0xf]
  %v157 = vld [vmem:[%s1 + $0xe8] sm:$0xf]
  %v158 = vld [vmem:[%s1 + $0xec] sm:$0xf]
  %v159 = vld [vmem:[%s1 + $0xf0] sm:$0xf]
  %v160 = vld [vmem:[%s1 + $0xf4] sm:$0xf]
  %v161 = vld [vmem:[%s1 + $0xf8] sm:$0xf]
  %v162 = vld [vmem:[%s1 + $0xfc] sm:$0xf]
  %v195 = vunpack.c.l.b16 %v67
  %v196 = vunpack.c.h.b16 %v67
  %v197 = vunpack.c.l.b16 %v68
  %v198 = vunpack.c.h.b16 %v68
  %v199 = vunpack.c.l.b16 %v69
  %v200 = vunpack.c.h.b16 %v69
  %v201 = vunpack.c.l.b16 %v70
  %v202 = vunpack.c.h.b16 %v70
  %v203 = vunpack.c.l.b16 %v71
  %v204 = vunpack.c.h.b16 %v71
  %v205 = vunpack.c.l.b16 %v72
  %v206 = vunpack.c.h.b16 %v72
  %v207 = vunpack.c.l.b16 %v73
  %v208 = vunpack.c.h.b16 %v73
  %v209 = vunpack.c.l.b16 %v74
  %v210 = vunpack.c.h.b16 %v74
  %v211 = vunpack.c.l.b16 %v75
  %v212 = vunpack.c.h.b16 %v75
  %v213 = vunpack.c.l.b16 %v76
  %v214 = vunpack.c.h.b16 %v76
  %v215 = vunpack.c.l.b16 %v77
  %v216 = vunpack.c.h.b16 %v77
  %v217 = vunpack.c.l.b16 %v78
  %v218 = vunpack.c.h.b16 %v78
  %v219 = vunpack.c.l.b16 %v79
  %v220 = vunpack.c.h.b16 %v79
  %v221 = vunpack.c.l.b16 %v80
  %v222 = vunpack.c.h.b16 %v80
  %v223 = vunpack.c.l.b16 %v81
  %v224 = vunpack.c.h.b16 %v81
  %v225 = vunpack.c.l.b16 %v82
  %v226 = vunpack.c.h.b16 %v82
  %v227 = vunpack.c.l.b16 %v83
  %v228 = vunpack.c.h.b16 %v83
  %v229 = vunpack.c.l.b16 %v84
  %v230 = vunpack.c.h.b16 %v84
  %v231 = vunpack.c.l.b16 %v85
  %v232 = vunpack.c.h.b16 %v85
  %v233 = vunpack.c.l.b16 %v86
  %v234 = vunpack.c.h.b16 %v86
  %v235 = vunpack.c.l.b16 %v87
  %v236 = vunpack.c.h.b16 %v87
  %v237 = vunpack.c.l.b16 %v88
  %v238 = vunpack.c.h.b16 %v88
  %v239 = vunpack.c.l.b16 %v89
  %v240 = vunpack.c.h.b16 %v89
  %v241 = vunpack.c.l.b16 %v90
  %v242 = vunpack.c.h.b16 %v90
  %v243 = vunpack.c.l.b16 %v91
  %v244 = vunpack.c.h.b16 %v91
  %v245 = vunpack.c.l.b16 %v92
  %v246 = vunpack.c.h.b16 %v92
  %v247 = vunpack.c.l.b16 %v93
  %v248 = vunpack.c.h.b16 %v93
  %v249 = vunpack.c.l.b16 %v94
  %v250 = vunpack.c.h.b16 %v94
  %v251 = vunpack.c.l.b16 %v95
  %v252 = vunpack.c.h.b16 %v95
  %v253 = vunpack.c.l.b16 %v96
  %v254 = vunpack.c.h.b16 %v96
  %v255 = vunpack.c.l.b16 %v97
  %v256 = vunpack.c.h.b16 %v97
  %v257 = vunpack.c.l.b16 %v98
  %v258 = vunpack.c.h.b16 %v98
  %v259 = vpack.c.b16 %v199, %v195
  %v260 = vpack.c.b16 %v200, %v196
  %v261 = vpack.c.b16 %v201, %v197
  %v262 = vpack.c.b16 %v202, %v198
  %v263 = vpack.c.b16 %v207, %v203
  %v264 = vpack.c.b16 %v208, %v204
  %v265 = vpack.c.b16 %v209, %v205
  %v266 = vpack.c.b16 %v210, %v206
  %v267 = vpack.c.b16 %v215, %v211
  %v268 = vpack.c.b16 %v216, %v212
  %v269 = vpack.c.b16 %v217, %v213
  %v270 = vpack.c.b16 %v218, %v214
  %v271 = vpack.c.b16 %v223, %v219
  %v272 = vpack.c.b16 %v224, %v220
  %v273 = vpack.c.b16 %v225, %v221
  %v274 = vpack.c.b16 %v226, %v222
  %v275 = vpack.c.b16 %v231, %v227
  %v276 = vpack.c.b16 %v232, %v228
  %v277 = vpack.c.b16 %v233, %v229
  %v278 = vpack.c.b16 %v234, %v230
  %v279 = vpack.c.b16 %v239, %v235
  %v280 = vpack.c.b16 %v240, %v236
  %v281 = vpack.c.b16 %v241, %v237
  %v282 = vpack.c.b16 %v242, %v238
  %v283 = vpack.c.b16 %v247, %v243
  %v284 = vpack.c.b16 %v248, %v244
  %v285 = vpack.c.b16 %v249, %v245
  %v286 = vpack.c.b16 %v250, %v246
  %v287 = vpack.c.b16 %v255, %v251
  %v288 = vpack.c.b16 %v256, %v252
  %v289 = vpack.c.b16 %v257, %v253
  %v290 = vpack.c.b16 %v258, %v254
  %v387 = vunpack.c.l.b16 %v99
  %v388 = vunpack.c.l.b16 %v100
  %v389 = vunpack.c.l.b16 %v101
  %v390 = vunpack.c.l.b16 %v102
  %v391 = vunpack.c.l.b16 %v103
  %v392 = vunpack.c.l.b16 %v104
  %v393 = vunpack.c.l.b16 %v105
  %v394 = vunpack.c.l.b16 %v106
  %v395 = vunpack.c.l.b16 %v107
  %v396 = vunpack.c.l.b16 %v108
  %v397 = vunpack.c.l.b16 %v109
  %v398 = vunpack.c.l.b16 %v110
  %v399 = vunpack.c.l.b16 %v111
  %v400 = vunpack.c.l.b16 %v112
  %v401 = vunpack.c.l.b16 %v113
  %v402 = vunpack.c.l.b16 %v114
  %v403 = vunpack.c.l.b16 %v115
  %v404 = vunpack.c.l.b16 %v116
  %v405 = vunpack.c.l.b16 %v117
  %v406 = vunpack.c.l.b16 %v118
  %v407 = vunpack.c.l.b16 %v119
  %v408 = vunpack.c.l.b16 %v120
  %v409 = vunpack.c.l.b16 %v121
  %v410 = vunpack.c.l.b16 %v122
  %v411 = vunpack.c.l.b16 %v123
  %v412 = vunpack.c.l.b16 %v124
  %v413 = vunpack.c.l.b16 %v125
  %v414 = vunpack.c.l.b16 %v126
  %v415 = vunpack.c.l.b16 %v127
  %v416 = vunpack.c.l.b16 %v128
  %v417 = vunpack.c.l.b16 %v129
  %v418 = vunpack.c.l.b16 %v130
  %v419 = vunpack.c.l.b16 %v131
  %v420 = vunpack.c.l.b16 %v132
  %v421 = vunpack.c.l.b16 %v133
  %v422 = vunpack.c.l.b16 %v134
  %v423 = vunpack.c.l.b16 %v135
  %v424 = vunpack.c.l.b16 %v136
  %v425 = vunpack.c.l.b16 %v137
  %v426 = vunpack.c.l.b16 %v138
  %v427 = vunpack.c.l.b16 %v139
  %v428 = vunpack.c.l.b16 %v140
  %v429 = vunpack.c.l.b16 %v141
  %v430 = vunpack.c.l.b16 %v142
  %v431 = vunpack.c.l.b16 %v143
  %v432 = vunpack.c.l.b16 %v144
  %v433 = vunpack.c.l.b16 %v145
  %v434 = vunpack.c.l.b16 %v146
  %v435 = vunpack.c.l.b16 %v147
  %v436 = vunpack.c.l.b16 %v148
  %v437 = vunpack.c.l.b16 %v149
  %v438 = vunpack.c.l.b16 %v150
  %v439 = vunpack.c.l.b16 %v151
  %v440 = vunpack.c.l.b16 %v152
  %v441 = vunpack.c.l.b16 %v153
  %v442 = vunpack.c.l.b16 %v154
  %v443 = vunpack.c.l.b16 %v155
  %v444 = vunpack.c.l.b16 %v156
  %v445 = vunpack.c.l.b16 %v157
  %v446 = vunpack.c.l.b16 %v158
  %v447 = vunpack.c.l.b16 %v159
  %v448 = vunpack.c.l.b16 %v160
  %v449 = vunpack.c.l.b16 %v161
  %v450 = vunpack.c.l.b16 %v162
  %v451 = vpack.c.b16 %v388, %v387
  %v452 = vpack.c.b16 %v390, %v389
  %v453 = vpack.c.b16 %v392, %v391
  %v454 = vpack.c.b16 %v394, %v393
  %v455 = vpack.c.b16 %v396, %v395
  %v456 = vpack.c.b16 %v398, %v397
  %v457 = vpack.c.b16 %v400, %v399
  %v458 = vpack.c.b16 %v402, %v401
  %v459 = vpack.c.b16 %v404, %v403
  %v460 = vpack.c.b16 %v406, %v405
  %v461 = vpack.c.b16 %v408, %v407
  %v462 = vpack.c.b16 %v410, %v409
  %v463 = vpack.c.b16 %v412, %v411
  %v464 = vpack.c.b16 %v414, %v413
  %v465 = vpack.c.b16 %v416, %v415
  %v466 = vpack.c.b16 %v418, %v417
  %v467 = vpack.c.b16 %v420, %v419
  %v468 = vpack.c.b16 %v422, %v421
  %v469 = vpack.c.b16 %v424, %v423
  %v470 = vpack.c.b16 %v426, %v425
  %v471 = vpack.c.b16 %v428, %v427
  %v472 = vpack.c.b16 %v430, %v429
  %v473 = vpack.c.b16 %v432, %v431
  %v474 = vpack.c.b16 %v434, %v433
  %v475 = vpack.c.b16 %v436, %v435
  %v476 = vpack.c.b16 %v438, %v437
  %v477 = vpack.c.b16 %v440, %v439
  %v478 = vpack.c.b16 %v442, %v441
  %v479 = vpack.c.b16 %v444, %v443
  %v480 = vpack.c.b16 %v446, %v445
  %v481 = vpack.c.b16 %v448, %v447
  %v482 = vpack.c.b16 %v450, %v449
  %515 = vmatprep.subr.bf16.mxu0 0
  %516 = vmatpush1.bf16.msra.mxu0 %v451
  %517 = vmatprep.subr.bf16.mxu0 0
  %518 = vmatpush1.bf16.msra.mxu0 %v452
  %519 = vmatprep.subr.bf16.mxu0 0
  %520 = vmatpush1.bf16.msra.mxu0 %v453
  %521 = vmatprep.subr.bf16.mxu0 0
  %522 = vmatpush1.bf16.msra.mxu0 %v454
  %523 = vmatprep.subr.bf16.mxu0 0
  %524 = vmatpush1.bf16.msra.mxu0 %v455
  %525 = vmatprep.subr.bf16.mxu0 0
  %526 = vmatpush1.bf16.msra.mxu0 %v456
  %527 = vmatprep.subr.bf16.mxu0 0
  %528 = vmatpush1.bf16.msra.mxu0 %v457
  %529 = vmatprep.subr.bf16.mxu0 0
  %530 = vmatpush1.bf16.msra.mxu0 %v458
  %531 = vmatprep.subr.bf16.mxu0 0
  %532 = vmatpush1.bf16.msra.mxu0 %v459
  %533 = vmatprep.subr.bf16.mxu0 0
  %534 = vmatpush1.bf16.msra.mxu0 %v460
  %535 = vmatprep.subr.bf16.mxu0 0
  %536 = vmatpush1.bf16.msra.mxu0 %v461
  %537 = vmatprep.subr.bf16.mxu0 0
  %538 = vmatpush1.bf16.msra.mxu0 %v462
  %539 = vmatprep.subr.bf16.mxu0 0
  %540 = vmatpush1.bf16.msra.mxu0 %v463
  %541 = vmatprep.subr.bf16.mxu0 0
  %542 = vmatpush1.bf16.msra.mxu0 %v464
  %543 = vmatprep.subr.bf16.mxu0 0
  %544 = vmatpush1.bf16.msra.mxu0 %v465
  %545 = vmatprep.subr.bf16.mxu0 0
  %546 = vmatpush1.bf16.msra.mxu0 %v466
  %547 = vmatprep.mubr.bf16.mxu0 %v260
  %548 = vmatmul.mubr.bf16.gmra.mrb[0].mxu0 %v259
  %v549 = vpop.f32.mrb[0].mxu0
  %v550 = vadd.f32 0.0, %v549
  %v551 = vpop.f32.mrb[0].mxu0
  %v552 = vpop.f32.mrb[0].mxu0
  %v553 = vadd.f32 0.0, %v552
  %v554 = vpop.f32.mrb[0].mxu0
  %555 = vmatprep.mubr.bf16.mxu0 %v264
  %556 = vmatmul.mubr.bf16.gmra.mrb[0].mxu0 %v263
  %v557 = vpop.f32.mrb[0].mxu0
  %v558 = vadd.f32 0.0, %v557
  %v559 = vpop.f32.mrb[0].mxu0
  %v560 = vpop.f32.mrb[0].mxu0
  %v561 = vadd.f32 0.0, %v560
  %v562 = vpop.f32.mrb[0].mxu0
  %563 = vmatprep.mubr.bf16.mxu0 %v268
  %564 = vmatmul.mubr.bf16.gmra.mrb[0].mxu0 %v267
  %v565 = vpop.f32.mrb[0].mxu0
  %v566 = vadd.f32 0.0, %v565
  %v567 = vpop.f32.mrb[0].mxu0
  %v568 = vpop.f32.mrb[0].mxu0
  %v569 = vadd.f32 0.0, %v568
  %v570 = vpop.f32.mrb[0].mxu0
  %571 = vmatprep.mubr.bf16.mxu0 %v272
  %572 = vmatmul.mubr.bf16.gmra.mrb[0].mxu0 %v271
  %v573 = vpop.f32.mrb[0].mxu0
  %v574 = vadd.f32 0.0, %v573
  %v575 = vpop.f32.mrb[0].mxu0
  %v576 = vpop.f32.mrb[0].mxu0
  %v577 = vadd.f32 0.0, %v576
  %v578 = vpop.f32.mrb[0].mxu0
  %579 = vmatprep.mubr.bf16.mxu0 %v276
  %580 = vmatmul.mubr.bf16.gmra.mrb[0].mxu0 %v275
  %v581 = vpop.f32.mrb[0].mxu0
  %v582 = vadd.f32 0.0, %v581
  %v583 = vpop.f32.mrb[0].mxu0
  %v584 = vpop.f32.mrb[0].mxu0
  %v585 = vadd.f32 0.0, %v584
  %v586 = vpop.f32.mrb[0].mxu0
  %587 = vmatprep.mubr.bf16.mxu0 %v280
  %588 = vmatmul.mubr.bf16.gmra.mrb[0].mxu0 %v279
  %v589 = vpop.f32.mrb[0].mxu0
  %v590 = vadd.f32 0.0, %v589
  %v591 = vpop.f32.mrb[0].mxu0
  %v592 = vpop.f32.mrb[0].mxu0
  %v593 = vadd.f32 0.0, %v592
  %v594 = vpop.f32.mrb[0].mxu0
  %595 = vmatprep.mubr.bf16.mxu0 %v284
  %596 = vmatmul.mubr.bf16.gmra.mrb[0].mxu0 %v283
  %v597 = vpop.f32.mrb[0].mxu0
  %v598 = vadd.f32 0.0, %v597
  %v599 = vpop.f32.mrb[0].mxu0
  %v600 = vpop.f32.mrb[0].mxu0
  %v601 = vadd.f32 0.0, %v600
  %v602 = vpop.f32.mrb[0].mxu0
  %603 = vmatprep.mubr.bf16.mxu0 %v288
  %604 = vmatmul.mubr.bf16.gmra.mrb[0].mxu0 %v287
  %v605 = vpop.f32.mrb[0].mxu0
  %v606 = vadd.f32 0.0, %v605
  %v607 = vpop.f32.mrb[0].mxu0
  %v608 = vpop.f32.mrb[0].mxu0
  %v609 = vadd.f32 0.0, %v608
  %v610 = vpop.f32.mrb[0].mxu0
  %611 = vdwg.mxu0
  %612 = vmatprep.subr.bf16.mxu0 0
  %613 = vmatpush1.bf16.msra.mxu0 %v467
  %614 = vmatprep.subr.bf16.mxu0 0
  %615 = vmatpush1.bf16.msra.mxu0 %v468
  %616 = vmatprep.subr.bf16.mxu0 0
  %617 = vmatpush1.bf16.msra.mxu0 %v469
  %618 = vmatprep.subr.bf16.mxu0 0
  %619 = vmatpush1.bf16.msra.mxu0 %v470
  %620 = vmatprep.subr.bf16.mxu0 0
  %621 = vmatpush1.bf16.msra.mxu0 %v471
  %622 = vmatprep.subr.bf16.mxu0 0
  %623 = vmatpush1.bf16.msra.mxu0 %v472
  %624 = vmatprep.subr.bf16.mxu0 0
  %625 = vmatpush1.bf16.msra.mxu0 %v473
  %626 = vmatprep.subr.bf16.mxu0 0
  %627 = vmatpush1.bf16.msra.mxu0 %v474
  %628 = vmatprep.subr.bf16.mxu0 0
  %629 = vmatpush1.bf16.msra.mxu0 %v475
  %630 = vmatprep.subr.bf16.mxu0 0
  %631 = vmatpush1.bf16.msra.mxu0 %v476
  %632 = vmatprep.subr.bf16.mxu0 0
  %633 = vmatpush1.bf16.msra.mxu0 %v477
  %634 = vmatprep.subr.bf16.mxu0 0
  %635 = vmatpush1.bf16.msra.mxu0 %v478
  %636 = vmatprep.subr.bf16.mxu0 0
  %637 = vmatpush1.bf16.msra.mxu0 %v479
  %638 = vmatprep.subr.bf16.mxu0 0
  %639 = vmatpush1.bf16.msra.mxu0 %v480
  %640 = vmatprep.subr.bf16.mxu0 0
  %641 = vmatpush1.bf16.msra.mxu0 %v481
  %642 = vmatprep.subr.bf16.mxu0 0
  %643 = vmatpush1.bf16.msra.mxu0 %v482
  %644 = vmatprep.mubr.bf16.mxu0 %v262
  %645 = vmatmul.mubr.bf16.gmra.mrb[0].mxu0 %v261
  %v646 = vpop.f32.mrb[0].mxu0
  %v647 = vadd.f32 %v550, %v646
  %v648 = vpop.f32.mrb[0].mxu0
  %v649 = vpop.f32.mrb[0].mxu0
  %v650 = vadd.f32 %v553, %v649
  %v651 = vpop.f32.mrb[0].mxu0
  %652 = vmatprep.mubr.bf16.mxu0 %v266
  %653 = vmatmul.mubr.bf16.gmra.mrb[0].mxu0 %v265
  %v654 = vpop.f32.mrb[0].mxu0
  %v655 = vadd.f32 %v558, %v654
  %v656 = vpop.f32.mrb[0].mxu0
  %v657 = vpop.f32.mrb[0].mxu0
  %v658 = vadd.f32 %v561, %v657
  %v659 = vpop.f32.mrb[0].mxu0
  %660 = vmatprep.mubr.bf16.mxu0 %v270
  %661 = vmatmul.mubr.bf16.gmra.mrb[0].mxu0 %v269
  %v662 = vpop.f32.mrb[0].mxu0
  %v663 = vadd.f32 %v566, %v662
  %v664 = vpop.f32.mrb[0].mxu0
  %v665 = vpop.f32.mrb[0].mxu0
  %v666 = vadd.f32 %v569, %v665
  %v667 = vpop.f32.mrb[0].mxu0
  %668 = vmatprep.mubr.bf16.mxu0 %v274
  %669 = vmatmul.mubr.bf16.gmra.mrb[0].mxu0 %v273
  %v670 = vpop.f32.mrb[0].mxu0
  %v671 = vadd.f32 %v574, %v670
  %v672 = vpop.f32.mrb[0].mxu0
  %v673 = vpop.f32.mrb[0].mxu0
  %v674 = vadd.f32 %v577, %v673
  %v675 = vpop.f32.mrb[0].mxu0
  %676 = vmatprep.mubr.bf16.mxu0 %v278
  %677 = vmatmul.mubr.bf16.gmra.mrb[0].mxu0 %v277
  %v678 = vpop.f32.mrb[0].mxu0
  %v679 = vadd.f32 %v582, %v678
  %v680 = vpop.f32.mrb[0].mxu0
  %v681 = vpop.f32.mrb[0].mxu0
  %v682 = vadd.f32 %v585, %v681
  %v683 = vpop.f32.mrb[0].mxu0
  %684 = vmatprep.mubr.bf16.mxu0 %v282
  %685 = vmatmul.mubr.bf16.gmra.mrb[0].mxu0 %v281
  %v686 = vpop.f32.mrb[0].mxu0
  %v687 = vadd.f32 %v590, %v686
  %v688 = vpop.f32.mrb[0].mxu0
  %v689 = vpop.f32.mrb[0].mxu0
  %v690 = vadd.f32 %v593, %v689
  %v691 = vpop.f32.mrb[0].mxu0
  %692 = vmatprep.mubr.bf16.mxu0 %v286
  %693 = vmatmul.mubr.bf16.gmra.mrb[0].mxu0 %v285
  %v694 = vpop.f32.mrb[0].mxu0
  %v695 = vadd.f32 %v598, %v694
  %v696 = vpop.f32.mrb[0].mxu0
  %v697 = vpop.f32.mrb[0].mxu0
  %v698 = vadd.f32 %v601, %v697
  %v699 = vpop.f32.mrb[0].mxu0
  %700 = vmatprep.mubr.bf16.mxu0 %v290
  %701 = vmatmul.mubr.bf16.gmra.mrb[0].mxu0 %v289
  %v702 = vpop.f32.mrb[0].mxu0
  %v703 = vadd.f32 %v606, %v702
  %v704 = vpop.f32.mrb[0].mxu0
  %v705 = vpop.f32.mrb[0].mxu0
  %v706 = vadd.f32 %v609, %v705
  %v707 = vpop.f32.mrb[0].mxu0
  %708 = vdwg.mxu0
  %v709 = vadd.f32 %v51, %v647
  %v710 = vadd.f32 %v52, %v650
  %v711 = vadd.f32 %v53, %v655
  %v712 = vadd.f32 %v54, %v658
  %v713 = vadd.f32 %v55, %v663
  %v714 = vadd.f32 %v56, %v666
  %v715 = vadd.f32 %v57, %v671
  %v716 = vadd.f32 %v58, %v674
  %v717 = vadd.f32 %v59, %v679
  %v718 = vadd.f32 %v60, %v682
  %v719 = vadd.f32 %v61, %v687
  %v720 = vadd.f32 %v62, %v690
  %v721 = vadd.f32 %v63, %v695
  %v722 = vadd.f32 %v64, %v698
  %v723 = vadd.f32 %v65, %v703
  %v724 = vadd.f32 %v66, %v706
  %725 = vst [vmem:[#allocation2] sm:$0xff] %v709
  %726 = vst [vmem:[#allocation2 + $0x8] sm:$0xff] %v710
  %727 = vst [vmem:[#allocation2 + $0x10] sm:$0xff] %v711
  %728 = vst [vmem:[#allocation2 + $0x18] sm:$0xff] %v712
  %729 = vst [vmem:[#allocation2 + $0x20] sm:$0xff] %v713
  %730 = vst [vmem:[#allocation2 + $0x28] sm:$0xff] %v714
  %731 = vst [vmem:[#allocation2 + $0x30] sm:$0xff] %v715
  %732 = vst [vmem:[#allocation2 + $0x38] sm:$0xff] %v716
  %733 = vst [vmem:[#allocation2 + $0x40] sm:$0xff] %v717
  %734 = vst [vmem:[#allocation2 + $0x48] sm:$0xff] %v718
  %735 = vst [vmem:[#allocation2 + $0x50] sm:$0xff] %v719
  %736 = vst [vmem:[#allocation2 + $0x58] sm:$0xff] %v720
  %737 = vst [vmem:[#allocation2 + $0x60] sm:$0xff] %v721
  %738 = vst [vmem:[#allocation2 + $0x68] sm:$0xff] %v722
  %739 = vst [vmem:[#allocation2 + $0x70] sm:$0xff] %v723
  %740 = vst [vmem:[#allocation2 + $0x78] sm:$0xff] %v724
  // Predicated region
  $region18: #{graph_rna_forward.9} parent=0 // pred_check
    %p741 = pneg %p15
  $region19: #{graph_rna_forward.9} parent=0 // pred_check_branch
    %743 = sbr.rel (%p741) target = $region21
  $region20: #{graph_rna_forward.9} parent=0 // pred_region
    %v744 = vld [vmem:[#allocation2] sm:$0xff]
    %v745 = vld [vmem:[#allocation2 + $0x8] sm:$0xff]
    %v746 = vld [vmem:[#allocation2 + $0x10] sm:$0xff]
    %v747 = vld [vmem:[#allocation2 + $0x18] sm:$0xff]
    %v748 = vld [vmem:[#allocation2 + $0x20] sm:$0xff]
    %v749 = vld [vmem:[#allocation2 + $0x28] sm:$0xff]
    %v750 = vld [vmem:[#allocation2 + $0x30] sm:$0xff]
    %v751 = vld [vmem:[#allocation2 + $0x38] sm:$0xff]
    %v752 = vld [vmem:[#allocation2 + $0x40] sm:$0xff]
    %v753 = vld [vmem:[#allocation2 + $0x48] sm:$0xff]
    %v754 = vld [vmem:[#allocation2 + $0x50] sm:$0xff]
    %v755 = vld [vmem:[#allocation2 + $0x58] sm:$0xff]
    %v756 = vld [vmem:[#allocation2 + $0x60] sm:$0xff]
    %v757 = vld [vmem:[#allocation2 + $0x68] sm:$0xff]
    %v758 = vld [vmem:[#allocation2 + $0x70] sm:$0xff]
    %v759 = vld [vmem:[#allocation2 + $0x78] sm:$0xff]
    %v760 = vmax.f32 %v744, 0.0
    %v761 = vmax.f32 %v745, 0.0
    %v762 = vmax.f32 %v746, 0.0
    %v763 = vmax.f32 %v747, 0.0
    %v764 = vmax.f32 %v748, 0.0
    %v765 = vmax.f32 %v749, 0.0
    %v766 = vmax.f32 %v750, 0.0
    %v767 = vmax.f32 %v751, 0.0
    %v768 = vmax.f32 %v752, 0.0
    %v769 = vmax.f32 %v753, 0.0
    %v770 = vmax.f32 %v754, 0.0
    %v771 = vmax.f32 %v755, 0.0
    %v772 = vmax.f32 %v756, 0.0
    %v773 = vmax.f32 %v757, 0.0
    %v774 = vmax.f32 %v758, 0.0
    %v775 = vmax.f32 %v759, 0.0
    %v776 = vpack.c.bf16 %v761, %v760
    %v777 = vpack.c.bf16 %v763, %v762
    %v778 = vpack.c.bf16 %v765, %v764
    %v779 = vpack.c.bf16 %v767, %v766
    %v780 = vpack.c.bf16 %v769, %v768
    %v781 = vpack.c.bf16 %v771, %v770
    %v782 = vpack.c.bf16 %v773, %v772
    %v783 = vpack.c.bf16 %v775, %v774
    %v792 = vunpack.c.l.b16 %v776
    %v793 = vunpack.c.h.b16 %v776
    %v794 = vunpack.c.l.b16 %v777
    %v795 = vunpack.c.h.b16 %v777
    %v796 = vunpack.c.l.b16 %v778
    %v797 = vunpack.c.h.b16 %v778
    %v798 = vunpack.c.l.b16 %v779
    %v799 = vunpack.c.h.b16 %v779
    %v800 = vunpack.c.l.b16 %v780
    %v801 = vunpack.c.h.b16 %v780
    %v802 = vunpack.c.l.b16 %v781
    %v803 = vunpack.c.h.b16 %v781
    %v804 = vunpack.c.l.b16 %v782
    %v805 = vunpack.c.h.b16 %v782
    %v806 = vunpack.c.l.b16 %v783
    %v807 = vunpack.c.h.b16 %v783
    %v808 = vpack.c.b16 %v792, %v792
    %v809 = vpack.c.b16 %v793, %v793
    %v810 = vpack.c.b16 %v794, %v794
    %v811 = vpack.c.b16 %v795, %v795
    %v812 = vpack.c.b16 %v796, %v796
    %v813 = vpack.c.b16 %v797, %v797
    %v814 = vpack.c.b16 %v798, %v798
    %v815 = vpack.c.b16 %v799, %v799
    %v816 = vpack.c.b16 %v800, %v800
    %v817 = vpack.c.b16 %v801, %v801
    %v818 = vpack.c.b16 %v802, %v802
    %v819 = vpack.c.b16 %v803, %v803
    %v820 = vpack.c.b16 %v804, %v804
    %v821 = vpack.c.b16 %v805, %v805
    %v822 = vpack.c.b16 %v806, %v806
    %v823 = vpack.c.b16 %v807, %v807
    %840 = vst [vmem:[%s3] sm:$0xf] %v808
    %841 = vst [vmem:[%s3 + $0x4] sm:$0xf] %v809
    %842 = vst [vmem:[%s3 + $0x8] sm:$0xf] %v810
    %843 = vst [vmem:[%s3 + $0xc] sm:$0xf] %v811
    %844 = vst [vmem:[%s3 + $0x10] sm:$0xf] %v812
    %845 = vst [vmem:[%s3 + $0x14] sm:$0xf] %v813
    %846 = vst [vmem:[%s3 + $0x18] sm:$0xf] %v814
    %847 = vst [vmem:[%s3 + $0x1c] sm:$0xf] %v815
    %848 = vst [vmem:[%s3 + $0x20] sm:$0xf] %v816
    %849 = vst [vmem:[%s3 + $0x24] sm:$0xf] %v817
    %850 = vst [vmem:[%s3 + $0x28] sm:$0xf] %v818
    %851 = vst [vmem:[%s3 + $0x2c] sm:$0xf] %v819
    %852 = vst [vmem:[%s3 + $0x30] sm:$0xf] %v820
    %853 = vst [vmem:[%s3 + $0x34] sm:$0xf] %v821
    %854 = vst [vmem:[%s3 + $0x38] sm:$0xf] %v822
    %855 = vst [vmem:[%s3 + $0x3c] sm:$0xf] %v823
  $region21: #{graph_rna_forward.9} parent=0 // pred_fallthru
    _
  // Predicated region
  $region22: #{graph_rna_forward.9} parent=0 // pred_check
    _
  $region23: #{graph_rna_forward.9} parent=0 // pred_check_branch
    %857 = sbr.rel (0) target = $region25
  $region24: #{graph_rna_forward.9} parent=0 // pred_region
    _
  $region25: #{graph_rna_forward.9} parent=0 // pred_fallthru
    _
  // Predicated region
  $region26: #{graph_rna_forward.9} parent=0 // pred_check
    _
  $region27: #{graph_rna_forward.9} parent=0 // pred_check_branch
    %859 = sbr.rel (0) target = $region29
  $region28: #{graph_rna_forward.9} parent=0 // pred_region
    _
  $region29: #{graph_rna_forward.9} parent=0 // pred_fallthru
    _

// kernel: graph_rna_forward.11
$region0: #{graph_rna_forward.11}
  #allocation0 [shape = 'u32[]', space=smem, size = 0x4, offset = 0x4, fixed_abs, tag = 'smem constant byte address 0x4 - core index']
  #allocation1 [shape = 'u32[144,128]{1,0:T(1,128)}', space=vmem, size = 0x12000, scoped, tag = 'internal scratch']
  %s0 = inlined_call_operand.vmem [shape: bf16[128,128], index: 0, kind: input, shape index: {}]
  %s1 = inlined_call_operand.vmem [shape: bf16[128,128], index: 1, kind: input, shape index: {}]
  %s2 = inlined_call_operand.vmem [shape: f32[1,128], index: 2, kind: output, shape index: {}]
  %s3 = sld [smem:[#allocation0]]
  $region18: #{graph_rna_forward.11} parent=0
    _
  %s5 = ssub.s32 1, %s3
  %s6 = scalar_select 0, %s5, %s3
  // Predicated region
  $region2: #{graph_rna_forward.11} parent=0 // pred_check
    _
  $region3: #{graph_rna_forward.11} parent=0 // pred_check_branch
    %8 = sbr.rel (0) target = $region5
  $region4: #{graph_rna_forward.11} parent=0 // pred_region
    _
  $region5: #{graph_rna_forward.11} parent=0 // pred_fallthru
    _
  // Predicated region
  $region6: #{graph_rna_forward.11} parent=0 // pred_check
    _
  $region7: #{graph_rna_forward.11} parent=0 // pred_check_branch
    %10 = sbr.rel (0) target = $region9
  $region8: #{graph_rna_forward.11} parent=0 // pred_region
    _
  $region9: #{graph_rna_forward.11} parent=0 // pred_fallthru
    _
  %v13 = vld [vmem:[%s0] sm:$0xf]
  %v14 = vld [vmem:[%s0 + $0x4] sm:$0xf]
  %v15 = vld [vmem:[%s0 + $0x8] sm:$0xf]
  %v16 = vld [vmem:[%s0 + $0xc] sm:$0xf]
  %v17 = vld [vmem:[%s0 + $0x10] sm:$0xf]
  %v18 = vld [vmem:[%s0 + $0x14] sm:$0xf]
  %v19 = vld [vmem:[%s0 + $0x18] sm:$0xf]
  %v20 = vld [vmem:[%s0 + $0x1c] sm:$0xf]
  %v21 = vld [vmem:[%s0 + $0x20] sm:$0xf]
  %v22 = vld [vmem:[%s0 + $0x24] sm:$0xf]
  %v23 = vld [vmem:[%s0 + $0x28] sm:$0xf]
  %v24 = vld [vmem:[%s0 + $0x2c] sm:$0xf]
  %v25 = vld [vmem:[%s0 + $0x30] sm:$0xf]
  %v26 = vld [vmem:[%s0 + $0x34] sm:$0xf]
  %v27 = vld [vmem:[%s0 + $0x38] sm:$0xf]
  %v28 = vld [vmem:[%s0 + $0x3c] sm:$0xf]
  %v29 = vld [vmem:[%s1] sm:$0xf]
  %v30 = vld [vmem:[%s1 + $0x4] sm:$0xf]
  %v31 = vld [vmem:[%s1 + $0x8] sm:$0xf]
  %v32 = vld [vmem:[%s1 + $0xc] sm:$0xf]
  %v33 = vld [vmem:[%s1 + $0x10] sm:$0xf]
  %v34 = vld [vmem:[%s1 + $0x14] sm:$0xf]
  %v35 = vld [vmem:[%s1 + $0x18] sm:$0xf]
  %v36 = vld [vmem:[%s1 + $0x1c] sm:$0xf]
  %v37 = vld [vmem:[%s1 + $0x20] sm:$0xf]
  %v38 = vld [vmem:[%s1 + $0x24] sm:$0xf]
  %v39 = vld [vmem:[%s1 + $0x28] sm:$0xf]
  %v40 = vld [vmem:[%s1 + $0x2c] sm:$0xf]
  %v41 = vld [vmem:[%s1 + $0x30] sm:$0xf]
  %v42 = vld [vmem:[%s1 + $0x34] sm:$0xf]
  %v43 = vld [vmem:[%s1 + $0x38] sm:$0xf]
  %v44 = vld [vmem:[%s1 + $0x3c] sm:$0xf]
  %v45 = vmul.bf16 %v13, %v29
  %v46 = vmul.bf16 %v14, %v30
  %v47 = vmul.bf16 %v15, %v31
  %v48 = vmul.bf16 %v16, %v32
  %v49 = vmul.bf16 %v17, %v33
  %v50 = vmul.bf16 %v18, %v34
  %v51 = vmul.bf16 %v19, %v35
  %v52 = vmul.bf16 %v20, %v36
  %v53 = vmul.bf16 %v21, %v37
  %v54 = vmul.bf16 %v22, %v38
  %v55 = vmul.bf16 %v23, %v39
  %v56 = vmul.bf16 %v24, %v40
  %v57 = vmul.bf16 %v25, %v41
  %v58 = vmul.bf16 %v26, %v42
  %v59 = vmul.bf16 %v27, %v43
  %v60 = vmul.bf16 %v28, %v44
  %v77 = vunpack.c.l.b16 %v45
  %v78 = vunpack.c.l.b16 %v46
  %v79 = vunpack.c.l.b16 %v47
  %v80 = vunpack.c.l.b16 %v48
  %v81 = vunpack.c.l.b16 %v49
  %v82 = vunpack.c.l.b16 %v50
  %v83 = vunpack.c.l.b16 %v51
  %v84 = vunpack.c.l.b16 %v52
  %v85 = vunpack.c.l.b16 %v53
  %v86 = vunpack.c.l.b16 %v54
  %v87 = vunpack.c.l.b16 %v55
  %v88 = vunpack.c.l.b16 %v56
  %v89 = vunpack.c.l.b16 %v57
  %v90 = vunpack.c.l.b16 %v58
  %v91 = vunpack.c.l.b16 %v59
  %v92 = vunpack.c.l.b16 %v60
  %v93 = vpack.c.b16 %v78, %v77
  %v94 = vpack.c.b16 %v80, %v79
  %v95 = vpack.c.b16 %v82, %v81
  %v96 = vpack.c.b16 %v84, %v83
  %v97 = vpack.c.b16 %v86, %v85
  %v98 = vpack.c.b16 %v88, %v87
  %v99 = vpack.c.b16 %v90, %v89
  %v100 = vpack.c.b16 %v92, %v91
  %109 = vmatprep.subr.bf16.mxu0 0
  %110 = vmatpush1.bf16.xpose.msra.mxu0 %v93
  %111 = vmatprep.subr.bf16.mxu0 0
  %112 = vmatpush1.bf16.xpose.msra.mxu0 %v94
  %113 = vmatprep.subr.bf16.mxu0 0
  %114 = vmatpush1.bf16.xpose.msra.mxu0 %v95
  %115 = vmatprep.subr.bf16.mxu0 0
  %116 = vmatpush1.bf16.xpose.msra.mxu0 %v96
  %117 = vmatprep.subr.bf16.mxu0 0
  %118 = vmatpush1.bf16.xpose.msra.mxu0 %v97
  %119 = vmatprep.subr.bf16.mxu0 0
  %120 = vmatpush1.bf16.xpose.msra.mxu0 %v98
  %121 = vmatprep.subr.bf16.mxu0 0
  %122 = vmatpush1.bf16.xpose.msra.mxu0 %v99
  %123 = vmatprep.subr.bf16.mxu0 0
  %124 = vmatpush1.bf16.xpose.msra.mxu0 %v100
  %125 = vmatprep.subr.bf16.mxu0 0
  %126 = vmatpush1.bf16.xpose.msra.mxu0 0
  %127 = vmatprep.subr.bf16.mxu0 0
  %128 = vmatpush1.bf16.xpose.msra.mxu0 0
  %129 = vmatprep.subr.bf16.mxu0 0
  %130 = vmatpush1.bf16.xpose.msra.mxu0 0
  %131 = vmatprep.subr.bf16.mxu0 0
  %132 = vmatpush1.bf16.xpose.msra.mxu0 0
  %133 = vmatprep.subr.bf16.mxu0 0
  %134 = vmatpush1.bf16.xpose.msra.mxu0 0
  %135 = vmatprep.subr.bf16.mxu0 0
  %136 = vmatpush1.bf16.xpose.msra.mxu0 0
  %137 = vmatprep.subr.bf16.mxu0 0
  %138 = vmatpush1.bf16.xpose.msra.mxu0 0
  %139 = vmatprep.subr.bf16.mxu0 0
  %140 = vmatpush1.bf16.xpose.msra.mxu0 0
  %141 = vmatprep.mubr.bf16.mxu0 0
  %142 = vmatmul.mubr.bf16.gmra.mrb[0].mxu0 1065369472
  %v143 = vpop.f32.mrb[0].mxu0
  %v144 = vadd.f32 0.0, %v143
  %v145 = vpop.f32.mrb[0].mxu0
  %v146 = vpop.f32.mrb[0].mxu0
  %v147 = vpop.f32.mrb[0].mxu0
  %148 = vdwg.mxu0
  %149 = vst [vmem:[%s2] sm:$0x1] %v144
  // Predicated region
  $region10: #{graph_rna_forward.11} parent=0 // pred_check
    _
  $region11: #{graph_rna_forward.11} parent=0 // pred_check_branch
    %151 = sbr.rel (0) target = $region13
  $region12: #{graph_rna_forward.11} parent=0 // pred_region
    _
  $region13: #{graph_rna_forward.11} parent=0 // pred_fallthru
    _
  // Predicated region
  $region14: #{graph_rna_forward.11} parent=0 // pred_check
    _
  $region15: #{graph_rna_forward.11} parent=0 // pred_check_branch
    %153 = sbr.rel (0) target = $region17
  $region16: #{graph_rna_forward.11} parent=0 // pred_region
    _
  $region17: #{graph_rna_forward.11} parent=0 // pred_fallthru
    _

// kernel: graph_rna_forward.10
$region0: #{graph_rna_forward.10}
  #allocation0 [shape = 'u32[]', space=smem, size = 0x4, offset = 0x4, fixed_abs, tag = 'smem constant byte address 0x4 - core index']
  #allocation1 [shape = 'u32[144,128]{1,0:T(1,128)}', space=vmem, size = 0x12000, scoped, tag = 'internal scratch']
  #allocation2 [shape = 'f32[128,128]{1,0:T(8,128)}', space=vmem, size = 0x10000, scoped, tag = 'scratch operand']
  %s0 = inlined_call_operand.vmem [shape: bf16[128,128], index: 0, kind: input, shape index: {}]
  %s1 = inlined_call_operand.vmem [shape: bf16[128,128], index: 1, kind: input, shape index: {}]
  %s2 = inlined_call_operand.vmem [shape: f32[128,128], index: 2, kind: input, shape index: {}]
  %s3 = inlined_call_operand.vmem [shape: bf16[128,128], index: 3, kind: output, shape index: {}]
  %s4 = sld [smem:[#allocation0]]
  $region30: #{graph_rna_forward.10} parent=0
    _
  %s6 = ssub.s32 1, %s4
  %s7 = scalar_select 0, %s6, %s4
  // Predicated region
  $region2: #{graph_rna_forward.10} parent=0 // pred_check
    _
  $region3: #{graph_rna_forward.10} parent=0 // pred_check_branch
    %9 = sbr.rel (0) target = $region5
  $region4: #{graph_rna_forward.10} parent=0 // pred_region
    _
  $region5: #{graph_rna_forward.10} parent=0 // pred_fallthru
    _
  // Predicated region
  $region6: #{graph_rna_forward.10} parent=0 // pred_check
    _
  $region7: #{graph_rna_forward.10} parent=0 // pred_check_branch
    %11 = sbr.rel (0) target = $region9
  $region8: #{graph_rna_forward.10} parent=0 // pred_region
    _
  $region9: #{graph_rna_forward.10} parent=0 // pred_fallthru
    _
  // Predicated region
  $region10: #{graph_rna_forward.10} parent=0 // pred_check
    _
  $region11: #{graph_rna_forward.10} parent=0 // pred_check_branch
    %13 = sbr.rel (0) target = $region13
  $region12: #{graph_rna_forward.10} parent=0 // pred_region
    _
  $region13: #{graph_rna_forward.10} parent=0 // pred_fallthru
    _
  %p15 = scmp.eq.s32.totalorder 0, 0
  // Predicated region
  $region14: #{graph_rna_forward.10} parent=0 // pred_check
    %p16 = pneg %p15
  $region15: #{graph_rna_forward.10} parent=0 // pred_check_branch
    %18 = sbr.rel (%p16) target = $region17
  $region16: #{graph_rna_forward.10} parent=0 // pred_region
    %v19 = vld [vmem:[%s2] sm:$0xff]
    %v20 = vld [vmem:[%s2 + $0x8] sm:$0xff]
    %v21 = vld [vmem:[%s2 + $0x10] sm:$0xff]
    %v22 = vld [vmem:[%s2 + $0x18] sm:$0xff]
    %v23 = vld [vmem:[%s2 + $0x20] sm:$0xff]
    %v24 = vld [vmem:[%s2 + $0x28] sm:$0xff]
    %v25 = vld [vmem:[%s2 + $0x30] sm:$0xff]
    %v26 = vld [vmem:[%s2 + $0x38] sm:$0xff]
    %v27 = vld [vmem:[%s2 + $0x40] sm:$0xff]
    %v28 = vld [vmem:[%s2 + $0x48] sm:$0xff]
    %v29 = vld [vmem:[%s2 + $0x50] sm:$0xff]
    %v30 = vld [vmem:[%s2 + $0x58] sm:$0xff]
    %v31 = vld [vmem:[%s2 + $0x60] sm:$0xff]
    %v32 = vld [vmem:[%s2 + $0x68] sm:$0xff]
    %v33 = vld [vmem:[%s2 + $0x70] sm:$0xff]
    %v34 = vld [vmem:[%s2 + $0x78] sm:$0xff]
    %35 = vst [vmem:[#allocation2] sm:$0xff] %v19
    %36 = vst [vmem:[#allocation2 + $0x8] sm:$0xff] %v20
    %37 = vst [vmem:[#allocation2 + $0x10] sm:$0xff] %v21
    %38 = vst [vmem:[#allocation2 + $0x18] sm:$0xff] %v22
    %39 = vst [vmem:[#allocation2 + $0x20] sm:$0xff] %v23
    %40 = vst [vmem:[#allocation2 + $0x28] sm:$0xff] %v24
    %41 = vst [vmem:[#allocation2 + $0x30] sm:$0xff] %v25
    %42 = vst [vmem:[#allocation2 + $0x38] sm:$0xff] %v26
    %43 = vst [vmem:[#allocation2 + $0x40] sm:$0xff] %v27
    %44 = vst [vmem:[#allocation2 + $0x48] sm:$0xff] %v28
    %45 = vst [vmem:[#allocation2 + $0x50] sm:$0xff] %v29
    %46 = vst [vmem:[#allocation2 + $0x58] sm:$0xff] %v30
    %47 = vst [vmem:[#allocation2 + $0x60] sm:$0xff] %v31
    %48 = vst [vmem:[#allocation2 + $0x68] sm:$0xff] %v32
    %49 = vst [vmem:[#allocation2 + $0x70] sm:$0xff] %v33
    %50 = vst [vmem:[#allocation2 + $0x78] sm:$0xff] %v34
  $region17: #{graph_rna_forward.10} parent=0 // pred_fallthru
    _
  %v51 = vld [vmem:[#allocation2] sm:$0xff]
  %v52 = vld [vmem:[#allocation2 + $0x8] sm:$0xff]
  %v53 = vld [vmem:[#allocation2 + $0x10] sm:$0xff]
  %v54 = vld [vmem:[#allocation2 + $0x18] sm:$0xff]
  %v55 = vld [vmem:[#allocation2 + $0x20] sm:$0xff]
  %v56 = vld [vmem:[#allocation2 + $0x28] sm:$0xff]
  %v57 = vld [vmem:[#allocation2 + $0x30] sm:$0xff]
  %v58 = vld [vmem:[#allocation2 + $0x38] sm:$0xff]
  %v59 = vld [vmem:[#allocation2 + $0x40] sm:$0xff]
  %v60 = vld [vmem:[#allocation2 + $0x48] sm:$0xff]
  %v61 = vld [vmem:[#allocation2 + $0x50] sm:$0xff]
  %v62 = vld [vmem:[#allocation2 + $0x58] sm:$0xff]
  %v63 = vld [vmem:[#allocation2 + $0x60] sm:$0xff]
  %v64 = vld [vmem:[#allocation2 + $0x68] sm:$0xff]
  %v65 = vld [vmem:[#allocation2 + $0x70] sm:$0xff]
  %v66 = vld [vmem:[#allocation2 + $0x78] sm:$0xff]
  %v67 = vld [vmem:[%s0] sm:$0xf]
  %v68 = vld [vmem:[%s0 + $0x4] sm:$0xf]
  %v69 = vld [vmem:[%s0 + $0x8] sm:$0xf]
  %v70 = vld [vmem:[%s0 + $0xc] sm:$0xf]
  %v71 = vld [vmem:[%s0 + $0x10] sm:$0xf]
  %v72 = vld [vmem:[%s0 + $0x14] sm:$0xf]
  %v73 = vld [vmem:[%s0 + $0x18] sm:$0xf]
  %v74 = vld [vmem:[%s0 + $0x1c] sm:$0xf]
  %v75 = vld [vmem:[%s0 + $0x20] sm:$0xf]
  %v76 = vld [vmem:[%s0 + $0x24] sm:$0xf]
  %v77 = vld [vmem:[%s0 + $0x28] sm:$0xf]
  %v78 = vld [vmem:[%s0 + $0x2c] sm:$0xf]
  %v79 = vld [vmem:[%s0 + $0x30] sm:$0xf]
  %v80 = vld [vmem:[%s0 + $0x34] sm:$0xf]
  %v81 = vld [vmem:[%s0 + $0x38] sm:$0xf]
  %v82 = vld [vmem:[%s0 + $0x3c] sm:$0xf]
  %v83 = vld [vmem:[%s1] sm:$0xf]
  %v84 = vld [vmem:[%s1 + $0x4] sm:$0xf]
  %v85 = vld [vmem:[%s1 + $0x8] sm:$0xf]
  %v86 = vld [vmem:[%s1 + $0xc] sm:$0xf]
  %v87 = vld [vmem:[%s1 + $0x10] sm:$0xf]
  %v88 = vld [vmem:[%s1 + $0x14] sm:$0xf]
  %v89 = vld [vmem:[%s1 + $0x18] sm:$0xf]
  %v90 = vld [vmem:[%s1 + $0x1c] sm:$0xf]
  %v91 = vld [vmem:[%s1 + $0x20] sm:$0xf]
  %v92 = vld [vmem:[%s1 + $0x24] sm:$0xf]
  %v93 = vld [vmem:[%s1 + $0x28] sm:$0xf]
  %v94 = vld [vmem:[%s1 + $0x2c] sm:$0xf]
  %v95 = vld [vmem:[%s1 + $0x30] sm:$0xf]
  %v96 = vld [vmem:[%s1 + $0x34] sm:$0xf]
  %v97 = vld [vmem:[%s1 + $0x38] sm:$0xf]
  %v98 = vld [vmem:[%s1 + $0x3c] sm:$0xf]
  %v115 = vunpack.c.l.b16 %v67
  %v116 = vunpack.c.l.b16 %v68
  %v117 = vunpack.c.l.b16 %v69
  %v118 = vunpack.c.l.b16 %v70
  %v119 = vunpack.c.l.b16 %v71
  %v120 = vunpack.c.l.b16 %v72
  %v121 = vunpack.c.l.b16 %v73
  %v122 = vunpack.c.l.b16 %v74
  %v123 = vunpack.c.l.b16 %v75
  %v124 = vunpack.c.l.b16 %v76
  %v125 = vunpack.c.l.b16 %v77
  %v126 = vunpack.c.l.b16 %v78
  %v127 = vunpack.c.l.b16 %v79
  %v128 = vunpack.c.l.b16 %v80
  %v129 = vunpack.c.l.b16 %v81
  %v130 = vunpack.c.l.b16 %v82
  %v131 = vpack.c.b16 %v116, %v115
  %v132 = vpack.c.b16 %v118, %v117
  %v133 = vpack.c.b16 %v120, %v119
  %v134 = vpack.c.b16 %v122, %v121
  %v135 = vpack.c.b16 %v124, %v123
  %v136 = vpack.c.b16 %v126, %v125
  %v137 = vpack.c.b16 %v128, %v127
  %v138 = vpack.c.b16 %v130, %v129
  %v163 = vunpack.c.l.b16 %v83
  %v164 = vunpack.c.l.b16 %v84
  %v165 = vunpack.c.l.b16 %v85
  %v166 = vunpack.c.l.b16 %v86
  %v167 = vunpack.c.l.b16 %v87
  %v168 = vunpack.c.l.b16 %v88
  %v169 = vunpack.c.l.b16 %v89
  %v170 = vunpack.c.l.b16 %v90
  %v171 = vunpack.c.l.b16 %v91
  %v172 = vunpack.c.l.b16 %v92
  %v173 = vunpack.c.l.b16 %v93
  %v174 = vunpack.c.l.b16 %v94
  %v175 = vunpack.c.l.b16 %v95
  %v176 = vunpack.c.l.b16 %v96
  %v177 = vunpack.c.l.b16 %v97
  %v178 = vunpack.c.l.b16 %v98
  %v179 = vpack.c.b16 %v164, %v163
  %v180 = vpack.c.b16 %v166, %v165
  %v181 = vpack.c.b16 %v168, %v167
  %v182 = vpack.c.b16 %v170, %v169
  %v183 = vpack.c.b16 %v172, %v171
  %v184 = vpack.c.b16 %v174, %v173
  %v185 = vpack.c.b16 %v176, %v175
  %v186 = vpack.c.b16 %v178, %v177
  %195 = vmatprep.subr.bf16.mxu0 0
  %196 = vmatpush1.bf16.msra.mxu0 %v179
  %197 = vmatprep.subr.bf16.mxu0 0
  %198 = vmatpush1.bf16.msra.mxu0 %v180
  %199 = vmatprep.subr.bf16.mxu0 0
  %200 = vmatpush1.bf16.msra.mxu0 %v181
  %201 = vmatprep.subr.bf16.mxu0 0
  %202 = vmatpush1.bf16.msra.mxu0 %v182
  %203 = vmatprep.subr.bf16.mxu0 0
  %204 = vmatpush1.bf16.msra.mxu0 %v183
  %205 = vmatprep.subr.bf16.mxu0 0
  %206 = vmatpush1.bf16.msra.mxu0 %v184
  %207 = vmatprep.subr.bf16.mxu0 0
  %208 = vmatpush1.bf16.msra.mxu0 %v185
  %209 = vmatprep.subr.bf16.mxu0 0
  %210 = vmatpush1.bf16.msra.mxu0 %v186
  %211 = vmatprep.subr.bf16.mxu0 0
  %212 = vmatpush1.bf16.msra.mxu0 0
  %213 = vmatprep.subr.bf16.mxu0 0
  %214 = vmatpush1.bf16.msra.mxu0 0
  %215 = vmatprep.subr.bf16.mxu0 0
  %216 = vmatpush1.bf16.msra.mxu0 0
  %217 = vmatprep.subr.bf16.mxu0 0
  %218 = vmatpush1.bf16.msra.mxu0 0
  %219 = vmatprep.subr.bf16.mxu0 0
  %220 = vmatpush1.bf16.msra.mxu0 0
  %221 = vmatprep.subr.bf16.mxu0 0
  %222 = vmatpush1.bf16.msra.mxu0 0
  %223 = vmatprep.subr.bf16.mxu0 0
  %224 = vmatpush1.bf16.msra.mxu0 0
  %225 = vmatprep.subr.bf16.mxu0 0
  %226 = vmatpush1.bf16.msra.mxu0 0
  %227 = vmatprep.mubr.bf16.mxu0 0
  %228 = vmatmul.mubr.bf16.gmra.mrb[0].mxu0 %v131
  %v229 = vpop.f32.mrb[0].mxu0
  %v230 = vadd.f32 0.0, %v229
  %v231 = vpop.f32.mrb[0].mxu0
  %v232 = vpop.f32.mrb[0].mxu0
  %v233 = vadd.f32 0.0, %v232
  %v234 = vpop.f32.mrb[0].mxu0
  %235 = vmatprep.mubr.bf16.mxu0 0
  %236 = vmatmul.mubr.bf16.gmra.mrb[0].mxu0 %v132
  %v237 = vpop.f32.mrb[0].mxu0
  %v238 = vadd.f32 0.0, %v237
  %v239 = vpop.f32.mrb[0].mxu0
  %v240 = vpop.f32.mrb[0].mxu0
  %v241 = vadd.f32 0.0, %v240
  %v242 = vpop.f32.mrb[0].mxu0
  %243 = vmatprep.mubr.bf16.mxu0 0
  %244 = vmatmul.mubr.bf16.gmra.mrb[0].mxu0 %v133
  %v245 = vpop.f32.mrb[0].mxu0
  %v246 = vadd.f32 0.0, %v245
  %v247 = vpop.f32.mrb[0].mxu0
  %v248 = vpop.f32.mrb[0].mxu0
  %v249 = vadd.f32 0.0, %v248
  %v250 = vpop.f32.mrb[0].mxu0
  %251 = vmatprep.mubr.bf16.mxu0 0
  %252 = vmatmul.mubr.bf16.gmra.mrb[0].mxu0 %v134
  %v253 = vpop.f32.mrb[0].mxu0
  %v254 = vadd.f32 0.0, %v253
  %v255 = vpop.f32.mrb[0].mxu0
  %v256 = vpop.f32.mrb[0].mxu0
  %v257 = vadd.f32 0.0, %v256
  %v258 = vpop.f32.mrb[0].mxu0
  %259 = vmatprep.mubr.bf16.mxu0 0
  %260 = vmatmul.mubr.bf16.gmra.mrb[0].mxu0 %v135
  %v261 = vpop.f32.mrb[0].mxu0
  %v262 = vadd.f32 0.0, %v261
  %v263 = vpop.f32.mrb[0].mxu0
  %v264 = vpop.f32.mrb[0].mxu0
  %v265 = vadd.f32 0.0, %v264
  %v266 = vpop.f32.mrb[0].mxu0
  %267 = vmatprep.mubr.bf16.mxu0 0
  %268 = vmatmul.mubr.bf16.gmra.mrb[0].mxu0 %v136
  %v269 = vpop.f32.mrb[0].mxu0
  %v270 = vadd.f32 0.0, %v269
  %v271 = vpop.f32.mrb[0].mxu0
  %v272 = vpop.f32.mrb[0].mxu0
  %v273 = vadd.f32 0.0, %v272
  %v274 = vpop.f32.mrb[0].mxu0
  %275 = vmatprep.mubr.bf16.mxu0 0
  %276 = vmatmul.mubr.bf16.gmra.mrb[0].mxu0 %v137
  %v277 = vpop.f32.mrb[0].mxu0
  %v278 = vadd.f32 0.0, %v277
  %v279 = vpop.f32.mrb[0].mxu0
  %v280 = vpop.f32.mrb[0].mxu0
  %v281 = vadd.f32 0.0, %v280
  %v282 = vpop.f32.mrb[0].mxu0
  %283 = vmatprep.mubr.bf16.mxu0 0
  %284 = vmatmul.mubr.bf16.gmra.mrb[0].mxu0 %v138
  %v285 = vpop.f32.mrb[0].mxu0
  %v286 = vadd.f32 0.0, %v285
  %v287 = vpop.f32.mrb[0].mxu0
  %v288 = vpop.f32.mrb[0].mxu0
  %v289 = vadd.f32 0.0, %v288
  %v290 = vpop.f32.mrb[0].mxu0
  %291 = vdwg.mxu0
  %v292 = vadd.f32 %v51, %v230
  %v293 = vadd.f32 %v52, %v233
  %v294 = vadd.f32 %v53, %v238
  %v295 = vadd.f32 %v54, %v241
  %v296 = vadd.f32 %v55, %v246
  %v297 = vadd.f32 %v56, %v249
  %v298 = vadd.f32 %v57, %v254
  %v299 = vadd.f32 %v58, %v257
  %v300 = vadd.f32 %v59, %v262
  %v301 = vadd.f32 %v60, %v265
  %v302 = vadd.f32 %v61, %v270
  %v303 = vadd.f32 %v62, %v273
  %v304 = vadd.f32 %v63, %v278
  %v305 = vadd.f32 %v64, %v281
  %v306 = vadd.f32 %v65, %v286
  %v307 = vadd.f32 %v66, %v289
  %308 = vst [vmem:[#allocation2] sm:$0xff] %v292
  %309 = vst [vmem:[#allocation2 + $0x8] sm:$0xff] %v293
  %310 = vst [vmem:[#allocation2 + $0x10] sm:$0xff] %v294
  %311 = vst [vmem:[#allocation2 + $0x18] sm:$0xff] %v295
  %312 = vst [vmem:[#allocation2 + $0x20] sm:$0xff] %v296
  %313 = vst [vmem:[#allocation2 + $0x28] sm:$0xff] %v297
  %314 = vst [vmem:[#allocation2 + $0x30] sm:$0xff] %v298
  %315 = vst [vmem:[#allocation2 + $0x38] sm:$0xff] %v299
  %316 = vst [vmem:[#allocation2 + $0x40] sm:$0xff] %v300
  %317 = vst [vmem:[#allocation2 + $0x48] sm:$0xff] %v301
  %318 = vst [vmem:[#allocation2 + $0x50] sm:$0xff] %v302
  %319 = vst [vmem:[#allocation2 + $0x58] sm:$0xff] %v303
  %320 = vst [vmem:[#allocation2 + $0x60] sm:$0xff] %v304
  %321 = vst [vmem:[#allocation2 + $0x68] sm:$0xff] %v305
  %322 = vst [vmem:[#allocation2 + $0x70] sm:$0xff] %v306
  %323 = vst [vmem:[#allocation2 + $0x78] sm:$0xff] %v307
  // Predicated region
  $region18: #{graph_rna_forward.10} parent=0 // pred_check
    %p324 = pneg %p15
  $region19: #{graph_rna_forward.10} parent=0 // pred_check_branch
    %326 = sbr.rel (%p324) target = $region21
  $region20: #{graph_rna_forward.10} parent=0 // pred_region
    %v327 = vld [vmem:[#allocation2] sm:$0xff]
    %v328 = vld [vmem:[#allocation2 + $0x8] sm:$0xff]
    %v329 = vld [vmem:[#allocation2 + $0x10] sm:$0xff]
    %v330 = vld [vmem:[#allocation2 + $0x18] sm:$0xff]
    %v331 = vld [vmem:[#allocation2 + $0x20] sm:$0xff]
    %v332 = vld [vmem:[#allocation2 + $0x28] sm:$0xff]
    %v333 = vld [vmem:[#allocation2 + $0x30] sm:$0xff]
    %v334 = vld [vmem:[#allocation2 + $0x38] sm:$0xff]
    %v335 = vld [vmem:[#allocation2 + $0x40] sm:$0xff]
    %v336 = vld [vmem:[#allocation2 + $0x48] sm:$0xff]
    %v337 = vld [vmem:[#allocation2 + $0x50] sm:$0xff]
    %v338 = vld [vmem:[#allocation2 + $0x58] sm:$0xff]
    %v339 = vld [vmem:[#allocation2 + $0x60] sm:$0xff]
    %v340 = vld [vmem:[#allocation2 + $0x68] sm:$0xff]
    %v341 = vld [vmem:[#allocation2 + $0x70] sm:$0xff]
    %v342 = vld [vmem:[#allocation2 + $0x78] sm:$0xff]
    %v343 = vmax.f32 %v327, 0.0
    %v344 = vmax.f32 %v328, 0.0
    %v345 = vmax.f32 %v329, 0.0
    %v346 = vmax.f32 %v330, 0.0
    %v347 = vmax.f32 %v331, 0.0
    %v348 = vmax.f32 %v332, 0.0
    %v349 = vmax.f32 %v333, 0.0
    %v350 = vmax.f32 %v334, 0.0
    %v351 = vmax.f32 %v335, 0.0
    %v352 = vmax.f32 %v336, 0.0
    %v353 = vmax.f32 %v337, 0.0
    %v354 = vmax.f32 %v338, 0.0
    %v355 = vmax.f32 %v339, 0.0
    %v356 = vmax.f32 %v340, 0.0
    %v357 = vmax.f32 %v341, 0.0
    %v358 = vmax.f32 %v342, 0.0
    %v359 = vpack.c.bf16 %v344, %v343
    %v360 = vpack.c.bf16 %v346, %v345
    %v361 = vpack.c.bf16 %v348, %v347
    %v362 = vpack.c.bf16 %v350, %v349
    %v363 = vpack.c.bf16 %v352, %v351
    %v364 = vpack.c.bf16 %v354, %v353
    %v365 = vpack.c.bf16 %v356, %v355
    %v366 = vpack.c.bf16 %v358, %v357
    %v375 = vunpack.c.l.b16 %v359
    %v376 = vunpack.c.h.b16 %v359
    %v377 = vunpack.c.l.b16 %v360
    %v378 = vunpack.c.h.b16 %v360
    %v379 = vunpack.c.l.b16 %v361
    %v380 = vunpack.c.h.b16 %v361
    %v381 = vunpack.c.l.b16 %v362
    %v382 = vunpack.c.h.b16 %v362
    %v383 = vunpack.c.l.b16 %v363
    %v384 = vunpack.c.h.b16 %v363
    %v385 = vunpack.c.l.b16 %v364
    %v386 = vunpack.c.h.b16 %v364
    %v387 = vunpack.c.l.b16 %v365
    %v388 = vunpack.c.h.b16 %v365
    %v389 = vunpack.c.l.b16 %v366
    %v390 = vunpack.c.h.b16 %v366
    %v391 = vpack.c.b16 %v375, %v375
    %v392 = vpack.c.b16 %v376, %v376
    %v393 = vpack.c.b16 %v377, %v377
    %v394 = vpack.c.b16 %v378, %v378
    %v395 = vpack.c.b16 %v379, %v379
    %v396 = vpack.c.b16 %v380, %v380
    %v397 = vpack.c.b16 %v381, %v381
    %v398 = vpack.c.b16 %v382, %v382
    %v399 = vpack.c.b16 %v383, %v383
    %v400 = vpack.c.b16 %v384, %v384
    %v401 = vpack.c.b16 %v385, %v385
    %v402 = vpack.c.b16 %v386, %v386
    %v403 = vpack.c.b16 %v387, %v387
    %v404 = vpack.c.b16 %v388, %v388
    %v405 = vpack.c.b16 %v389, %v389
    %v406 = vpack.c.b16 %v390, %v390
    %423 = vst [vmem:[%s3] sm:$0xf] %v391
    %424 = vst [vmem:[%s3 + $0x4] sm:$0xf] %v392
    %425 = vst [vmem:[%s3 + $0x8] sm:$0xf] %v393
    %426 = vst [vmem:[%s3 + $0xc] sm:$0xf] %v394
    %427 = vst [vmem:[%s3 + $0x10] sm:$0xf] %v395
    %428 = vst [vmem:[%s3 + $0x14] sm:$0xf] %v396
    %429 = vst [vmem:[%s3 + $0x18] sm:$0xf] %v397
    %430 = vst [vmem:[%s3 + $0x1c] sm:$0xf] %v398
    %431 = vst [vmem:[%s3 + $0x20] sm:$0xf] %v399
    %432 = vst [vmem:[%s3 + $0x24] sm:$0xf] %v400
    %433 = vst [vmem:[%s3 + $0x28] sm:$0xf] %v401
    %434 = vst [vmem:[%s3 + $0x2c] sm:$0xf] %v402
    %435 = vst [vmem:[%s3 + $0x30] sm:$0xf] %v403
    %436 = vst [vmem:[%s3 + $0x34] sm:$0xf] %v404
    %437 = vst [vmem:[%s3 + $0x38] sm:$0xf] %v405
    %438 = vst [vmem:[%s3 + $0x3c] sm:$0xf] %v406
  $region21: #{graph_rna_forward.10} parent=0 // pred_fallthru
    _
  // Predicated region
  $region22: #{graph_rna_forward.10} parent=0 // pred_check
    _
  $region23: #{graph_rna_forward.10} parent=0 // pred_check_branch
    %440 = sbr.rel (0) target = $region25
  $region24: #{graph_rna_forward.10} parent=0 // pred_region
    _
  $region25: #{graph_rna_forward.10} parent=0 // pred_fallthru
    _
  // Predicated region
  $region26: #{graph_rna_forward.10} parent=0 // pred_check
    _
  $region27: #{graph_rna_forward.10} parent=0 // pred_check_branch
    %442 = sbr.rel (0) target = $region29
  $region28: #{graph_rna_forward.10} parent=0 // pred_region
    _
  $region29: #{graph_rna_forward.10} parent=0 // pred_fallthru
    _

</llo_original>
